<compile_context>
chip_gen: v6e
topology: v6e:2x2x1
jax: 0.10.0
libtpu: 0.0.40
codegen_flags: <defaults>
</compile_context>

<pallas_src>
import functools

import jax
import jax.numpy as jnp
import numpy as np
from jax.experimental import pallas as pl
from jax.experimental.pallas import tpu as pltpu  # noqa: F401  (not needed: grid-less, whole-VMEM kernel)


# ----------------------------------------------------------------------------
# Fused forward kernel.  PyTorch GRU gate order: r, z, n.
# Per-layer result-slab layout (G = 4H lanes):
#   [ 0:2H )  = W_i[rz] x + W_h[rz] h + b_i[rz] + b_h[rz]
#   [2H:3H )  = W_in x + b_in
#   [3H:4H )  = W_hn h + b_hn
# ----------------------------------------------------------------------------
def _fused_forward_kernel(idx_ref, tbl_ref, wblk_ref, bias_ref,
                          lin_w_ref, lin_b_ref, out_ref, *, T, Bp, H, V):
    G = 4 * H
    TB = T * Bp

    # ---- Prologue: embedding lookup fused with layer-0 input projection. ----
    # one-hot @ (emb @ W_ih0) is exact (0/1 weights) and runs on the MXU.
    idx = idx_ref[...]                                           # (TB, 1) int32
    iota = jax.lax.broadcasted_iota(jnp.int32, (TB, V), 1)
    onehot = jnp.where(idx == iota, 1.0, 0.0).astype(jnp.float32)
    gx0 = jnp.dot(onehot, tbl_ref[...],
                  preferred_element_type=jnp.float32)            # (TB, G)

    # Biases for all three layers, broadcast once (hoisted out of the loop).
    bias = jnp.broadcast_to(bias_ref[...], (Bp, 3 * G))

    def gate(slab, h_prev):
        rz = jax.nn.sigmoid(slab[:, :2 * H])                     # one EUP slab
        r = rz[:, :H]
        z = rz[:, H:2 * H]
        n = jnp.tanh(slab[:, 2 * H:3 * H] + r * slab[:, 3 * H:4 * H])
        return (1.0 - z) * n + z * h_prev

    zero_h = jnp.zeros((Bp, H), jnp.float32)
    h0, h1, h2 = zero_h, zero_h, zero_h
    ys = []

    # ---- Wavefront over time: step s runs layer0@t=s, layer1@t=s-1,
    # layer2@t=s-2.  At the start of step s, h0/h1 already hold exactly the
    # inputs layers 1/2 need for their timestep, so the operand is [h0|h1|h2]
    # and ONE block-bidiagonal matmul yields all three layers' gate slabs. ----
    for s in range(T + 2):
        op = jnp.concatenate([h0, h1, h2], axis=1)               # (Bp, 3H)
        g = (jnp.dot(op, wblk_ref[...],
                     preferred_element_type=jnp.float32) + bias) # (Bp, 3G)
        if s < T:                                   # layer 0, t = s
            h0 = gate(g[:, 0:G] + gx0[s * Bp:(s + 1) * Bp, :], h0)
        if 1 <= s <= T:                             # layer 1, t = s - 1
            h1 = gate(g[:, G:2 * G], h1)
        if 2 <= s <= T + 1:                         # layer 2, t = s - 2
            h2 = gate(g[:, 2 * G:3 * G], h2)
            ys.append(h2)                           # stays in vregs

    # ---- Final linear (output padded to 128 lanes => unmasked stores). -----
    y = jnp.concatenate(ys, axis=0)                              # (TB, H)
    out_ref[...] = (jnp.dot(y, lin_w_ref[...],
                            preferred_element_type=jnp.float32)
                    + lin_b_ref[...]).astype(out_ref.dtype)


# ----------------------------------------------------------------------------
# Parameter construction (deterministic, PyTorch-style uniform init).
# ----------------------------------------------------------------------------
def init_params(key, num_hyponyms, num_hypernyms, embedding_dim, hidden_dim):
    keys = jax.random.split(key, 20)
    k_it = iter(keys)
    H = hidden_dim

    def unif(k, shape, bound):
        return jax.random.uniform(k, shape, jnp.float32, -bound, bound)

    bound = 1.0 / np.sqrt(H)
    params = {"embedding": jax.random.normal(
        next(k_it), (num_hyponyms, embedding_dim), jnp.float32)}

    # GRU layers: gru1 has 2 layers, gru2 has 1.  Weights pre-transposed.
    layer_dims = [embedding_dim, H, H]
    params["gru_layers"] = []
    for din in layer_dims:
        layer = {
            "w_ih_t": unif(next(k_it), (din, 3 * H), bound),   # (Din, 3H)
            "w_hh_t": unif(next(k_it), (H, 3 * H), bound),     # (H, 3H)
            "b_ih": unif(next(k_it), (3 * H,), bound),
            "b_hh": unif(next(k_it), (3 * H,), bound),
        }
        params["gru_layers"].append(layer)

    lbound = 1.0 / np.sqrt(H)
    params["lin_w_t"] = unif(next(k_it), (H, num_hypernyms), lbound)
    params["lin_b"] = unif(next(k_it), (num_hypernyms,), lbound)
    return params


# ----------------------------------------------------------------------------
# Full forward pass (single pallas_call, no grid, everything VMEM-resident).
# ----------------------------------------------------------------------------
@functools.partial(jax.jit, static_argnames=("hidden_dim",))
def hypernym_hyponym_gru_forward(params, hyponym, hidden_dim):
    T, B = hyponym.shape
    H = hidden_dim
    G = 4 * H
    V, E = params["embedding"].shape
    O = params["lin_b"].shape[0]
    OPAD = ((O + 127) // 128) * 128          # lane-dense output
    Bp = ((B + 7) // 8) * 8                  # sublane-aligned batch
    TB = T * Bp

    # Pad batch with dummy token 0 (outputs sliced off below).
    idx = jnp.pad(hyponym.astype(jnp.int32), ((0, 0), (0, Bp - B)))
    idx2d = idx.reshape(TB, 1)

    l0, l1, l2 = params["gru_layers"]

    def uni_bias(layer):
        b_ih, b_hh = layer["b_ih"], layer["b_hh"]
        # [b_i(rz)+b_h(rz) | b_in | b_hn]  — matches the 4H slab layout.
        return jnp.concatenate([b_ih[:2 * H] + b_hh[:2 * H],
                                b_ih[2 * H:], b_hh[2 * H:]])

    def uni_in_w(w_ih_t):        # (Din, 3H) -> (Din, 4H): [rz | n | 0]
        return jnp.concatenate(
            [w_ih_t, jnp.zeros((w_ih_t.shape[0], H), jnp.float32)], axis=1)

    def uni_hid_w(w_hh_t):       # (H, 3H) -> (H, 4H): [rz | 0 | n]
        return jnp.concatenate(
            [w_hh_t[:, :2 * H], jnp.zeros((H, H), jnp.float32),
             w_hh_t[:, 2 * H:]], axis=1)

    # Embedding folded into layer-0's input projection: (V, 4H).
    fused_tbl = uni_in_w(params["embedding"] @ l0["w_ih_t"])

    # Block-bidiagonal fused weight (3H, 3*4H):
    #   row block h0 -> [ layer0 hidden | layer1 input |      0        ]
    #   row block h1 -> [      0        | layer1 hidden | layer2 input ]
    #   row block h2 -> [      0        |      0        | layer2 hidden]
    Z = jnp.zeros((H, G), jnp.float32)
    w_block = jnp.concatenate([
        jnp.concatenate([uni_hid_w(l0["w_hh_t"]), uni_in_w(l1["w_ih_t"]), Z], axis=1),
        jnp.concatenate([Z, uni_hid_w(l1["w_hh_t"]), uni_in_w(l2["w_ih_t"])], axis=1),
        jnp.concatenate([Z, Z, uni_hid_w(l2["w_hh_t"])], axis=1),
    ], axis=0)                                                   # (3H, 3G)

    bias = jnp.concatenate([uni_bias(l0), uni_bias(l1),
                            uni_bias(l2)]).reshape(1, 3 * G)

    lin_w = jnp.pad(params["lin_w_t"], ((0, 0), (0, OPAD - O)))
    lin_b = jnp.pad(params["lin_b"], (0, OPAD - O)).reshape(1, OPAD)

    kernel = functools.partial(_fused_forward_kernel, T=T, Bp=Bp, H=H, V=V)
    out = pl.pallas_call(
        kernel,
        out_shape=jax.ShapeDtypeStruct((TB, OPAD), jnp.float32),
        # No grid / no scratch: total footprint (weights + activations +
        # padded output) is <100 KiB, far under every generation's VMEM.
    )(idx2d, fused_tbl, w_block, bias, lin_w, lin_b)

    return out.reshape(T, Bp, OPAD)[:, :B, :O]


# ----------------------------------------------------------------------------
# Pure-JAX reference for correctness checking.
# ----------------------------------------------------------------------------
def _ref_gru_layer(x, layer, H):
    def step(h, x_t):
        gx = x_t @ layer["w_ih_t"] + layer["b_ih"]
        gh = h @ layer["w_hh_t"] + layer["b_hh"]
        r = jax.nn.sigmoid(gx[:, :H] + gh[:, :H])
        z = jax.nn.sigmoid(gx[:, H:2 * H] + gh[:, H:2 * H])
        n = jnp.tanh(gx[:, 2 * H:] + r * gh[:, 2 * H:])
        h_new = (1.0 - z) * n + z * h
        return h_new, h_new

    B = x.shape[1]
    _, ys = jax.lax.scan(step, jnp.zeros((B, H), jnp.float32), x)
    return ys


def _ref_forward(params, hyponym, H):
    x = jnp.take(params["embedding"], hyponym, axis=0)
    for layer in params["gru_layers"]:
        x = _ref_gru_layer(x, layer, H)
    return x @ params["lin_w_t"] + params["lin_b"]


# ----------------------------------------------------------------------------
if __name__ == "__main__":
    num_hyponyms = 50
    num_hypernyms = 20
    embedding_dim = 16
    hidden_dim = 32
    T, B = 8, 4

    key = jax.random.PRNGKey(0)
    k_params, k_idx = jax.random.split(key)
    params = init_params(k_params, num_hyponyms, num_hypernyms,
                         embedding_dim, hidden_dim)
    hyponym = jax.random.randint(k_idx, (T, B), 0, num_hyponyms, jnp.int32)

    out = hypernym_hyponym_gru_forward(params, hyponym, hidden_dim)
    out = jax.block_until_ready(out)

    assert out.shape == (T, B, num_hypernyms), out.shape

    ref = jax.block_until_ready(_ref_forward(params, hyponym, hidden_dim))
    np.testing.assert_allclose(np.asarray(out), np.asarray(ref),
                               rtol=5e-3, atol=5e-3)

    print("KERNEL_OK")
</pallas_src>

<mosaic_0001>
module attributes {stable_mosaic.version = 11 : i64} {
  func.func @_fused_forward_kernel(%arg0: memref<64x1xi32, #tpu.memory_space<vmem>>, %arg1: memref<50x128xf32, #tpu.memory_space<vmem>>, %arg2: memref<96x384xf32, #tpu.memory_space<vmem>>, %arg3: memref<1x384xf32, #tpu.memory_space<vmem>>, %arg4: memref<32x128xf32, #tpu.memory_space<vmem>>, %arg5: memref<1x128xf32, #tpu.memory_space<vmem>>, %arg6: memref<64x128xf32, #tpu.memory_space<vmem>>) attributes {dimension_semantics = [], scalar_prefetch = 0 : i64, scratch_operands = 0 : i64, tpu.core_type = #tpu.core_type<tc>} {
    %c0 = arith.constant 0 : index
    %c0_0 = arith.constant 0 : index
    %0 = vector.load %arg0[%c0, %c0_0] : memref<64x1xi32, #tpu.memory_space<vmem>>, vector<64x1xi32>
    %1 = tpu.iota {dimensions = array<i32: 1>} : vector<64x50xi32>
    %2 = vector.broadcast %0 : vector<64x1xi32> to vector<64x50xi32>
    %3 = arith.cmpi eq, %2, %1 : vector<64x50xi32>
    %cst = arith.constant 1.000000e+00 : f32
    %cst_1 = arith.constant 0.000000e+00 : f32
    %4 = vector.broadcast %cst : f32 to vector<64x50xf32>
    %5 = vector.broadcast %cst_1 : f32 to vector<64x50xf32>
    %6 = arith.select %3, %4, %5 : vector<64x50xi1>, vector<64x50xf32>
    %c0_2 = arith.constant 0 : index
    %c0_3 = arith.constant 0 : index
    %7 = vector.load %arg1[%c0_2, %c0_3] : memref<50x128xf32, #tpu.memory_space<vmem>>, vector<50x128xf32>
    %cst_4 = arith.constant dense<0.000000e+00> : vector<64x128xf32>
    %8 = tpu.matmul %6, %7, %cst_4 {dimension_numbers = #tpu.dot_dimension_numbers<[1], [0], [0], [1], [0, 0, 1, 1], [], []>} : vector<64x50xf32>, vector<50x128xf32>, vector<64x128xf32> -> vector<64x128xf32>
    %c0_5 = arith.constant 0 : index
    %c0_6 = arith.constant 0 : index
    %9 = vector.load %arg3[%c0_5, %c0_6] : memref<1x384xf32, #tpu.memory_space<vmem>>, vector<1x384xf32>
    %10 = vector.shape_cast %9 : vector<1x384xf32> to vector<1x384xf32>
    %11 = vector.broadcast %10 : vector<1x384xf32> to vector<8x384xf32>
    %cst_7 = arith.constant 0.000000e+00 : f32
    %12 = vector.broadcast %cst_7 : f32 to vector<8x32xf32>
    %13 = tpu.concatenate %12, %12, %12 in 1 : vector<8x32xf32>, vector<8x32xf32>, vector<8x32xf32> -> vector<8x96xf32>
    %c0_8 = arith.constant 0 : index
    %c0_9 = arith.constant 0 : index
    %14 = vector.load %arg2[%c0_8, %c0_9] : memref<96x384xf32, #tpu.memory_space<vmem>>, vector<96x384xf32>
    %cst_10 = arith.constant dense<0.000000e+00> : vector<8x384xf32>
    %15 = tpu.matmul %13, %14, %cst_10 {dimension_numbers = #tpu.dot_dimension_numbers<[1], [0], [0], [1], [0, 0, 1, 1], [], []>} : vector<8x96xf32>, vector<96x384xf32>, vector<8x384xf32> -> vector<8x384xf32>
    %16 = arith.addf %15, %11 : vector<8x384xf32>
    %17 = vector.extract_strided_slice %16 {offsets = [0, 0], sizes = [8, 128], strides = [1, 1]} : vector<8x384xf32> to vector<8x128xf32>
    %18 = vector.extract_strided_slice %8 {offsets = [0, 0], sizes = [8, 128], strides = [1, 1]} : vector<64x128xf32> to vector<8x128xf32>
    %19 = arith.addf %17, %18 : vector<8x128xf32>
    %20 = vector.extract_strided_slice %19 {offsets = [0, 0], sizes = [8, 64], strides = [1, 1]} : vector<8x128xf32> to vector<8x64xf32>
    %21 = arith.negf %20 : vector<8x64xf32>
    %22 = math.exp %21 : vector<8x64xf32>
    %cst_11 = arith.constant 1.000000e+00 : f32
    %23 = vector.broadcast %cst_11 : f32 to vector<8x64xf32>
    %24 = arith.addf %23, %22 : vector<8x64xf32>
    %25 = arith.divf %23, %24 : vector<8x64xf32>
    %26 = vector.extract_strided_slice %25 {offsets = [0, 0], sizes = [8, 32], strides = [1, 1]} : vector<8x64xf32> to vector<8x32xf32>
    %27 = vector.extract_strided_slice %25 {offsets = [0, 32], sizes = [8, 32], strides = [1, 1]} : vector<8x64xf32> to vector<8x32xf32>
    %28 = vector.extract_strided_slice %19 {offsets = [0, 64], sizes = [8, 32], strides = [1, 1]} : vector<8x128xf32> to vector<8x32xf32>
    %29 = vector.extract_strided_slice %19 {offsets = [0, 96], sizes = [8, 32], strides = [1, 1]} : vector<8x128xf32> to vector<8x32xf32>
    %30 = arith.mulf %26, %29 : vector<8x32xf32>
    %31 = arith.addf %28, %30 : vector<8x32xf32>
    %32 = math.tanh %31 : vector<8x32xf32>
    %cst_12 = arith.constant 1.000000e+00 : f32
    %33 = vector.broadcast %cst_12 : f32 to vector<8x32xf32>
    %34 = arith.subf %33, %27 : vector<8x32xf32>
    %35 = arith.mulf %34, %32 : vector<8x32xf32>
    %36 = arith.mulf %27, %12 : vector<8x32xf32>
    %37 = arith.addf %35, %36 : vector<8x32xf32>
    %38 = tpu.concatenate %37, %12, %12 in 1 : vector<8x32xf32>, vector<8x32xf32>, vector<8x32xf32> -> vector<8x96xf32>
    %c0_13 = arith.constant 0 : index
    %c0_14 = arith.constant 0 : index
    %39 = vector.load %arg2[%c0_13, %c0_14] : memref<96x384xf32, #tpu.memory_space<vmem>>, vector<96x384xf32>
    %cst_15 = arith.constant dense<0.000000e+00> : vector<8x384xf32>
    %40 = tpu.matmul %38, %39, %cst_15 {dimension_numbers = #tpu.dot_dimension_numbers<[1], [0], [0], [1], [0, 0, 1, 1], [], []>} : vector<8x96xf32>, vector<96x384xf32>, vector<8x384xf32> -> vector<8x384xf32>
    %41 = arith.addf %40, %11 : vector<8x384xf32>
    %42 = vector.extract_strided_slice %41 {offsets = [0, 0], sizes = [8, 128], strides = [1, 1]} : vector<8x384xf32> to vector<8x128xf32>
    %43 = vector.extract_strided_slice %8 {offsets = [8, 0], sizes = [8, 128], strides = [1, 1]} : vector<64x128xf32> to vector<8x128xf32>
    %44 = arith.addf %42, %43 : vector<8x128xf32>
    %45 = vector.extract_strided_slice %44 {offsets = [0, 0], sizes = [8, 64], strides = [1, 1]} : vector<8x128xf32> to vector<8x64xf32>
    %46 = arith.negf %45 : vector<8x64xf32>
    %47 = math.exp %46 : vector<8x64xf32>
    %cst_16 = arith.constant 1.000000e+00 : f32
    %48 = vector.broadcast %cst_16 : f32 to vector<8x64xf32>
    %49 = arith.addf %48, %47 : vector<8x64xf32>
    %50 = arith.divf %48, %49 : vector<8x64xf32>
    %51 = vector.extract_strided_slice %50 {offsets = [0, 0], sizes = [8, 32], strides = [1, 1]} : vector<8x64xf32> to vector<8x32xf32>
    %52 = vector.extract_strided_slice %50 {offsets = [0, 32], sizes = [8, 32], strides = [1, 1]} : vector<8x64xf32> to vector<8x32xf32>
    %53 = vector.extract_strided_slice %44 {offsets = [0, 64], sizes = [8, 32], strides = [1, 1]} : vector<8x128xf32> to vector<8x32xf32>
    %54 = vector.extract_strided_slice %44 {offsets = [0, 96], sizes = [8, 32], strides = [1, 1]} : vector<8x128xf32> to vector<8x32xf32>
    %55 = arith.mulf %51, %54 : vector<8x32xf32>
    %56 = arith.addf %53, %55 : vector<8x32xf32>
    %57 = math.tanh %56 : vector<8x32xf32>
    %cst_17 = arith.constant 1.000000e+00 : f32
    %58 = vector.broadcast %cst_17 : f32 to vector<8x32xf32>
    %59 = arith.subf %58, %52 : vector<8x32xf32>
    %60 = arith.mulf %59, %57 : vector<8x32xf32>
    %61 = arith.mulf %52, %37 : vector<8x32xf32>
    %62 = arith.addf %60, %61 : vector<8x32xf32>
    %63 = vector.extract_strided_slice %41 {offsets = [0, 128], sizes = [8, 128], strides = [1, 1]} : vector<8x384xf32> to vector<8x128xf32>
    %64 = vector.extract_strided_slice %63 {offsets = [0, 0], sizes = [8, 64], strides = [1, 1]} : vector<8x128xf32> to vector<8x64xf32>
    %65 = arith.negf %64 : vector<8x64xf32>
    %66 = math.exp %65 : vector<8x64xf32>
    %cst_18 = arith.constant 1.000000e+00 : f32
    %67 = vector.broadcast %cst_18 : f32 to vector<8x64xf32>
    %68 = arith.addf %67, %66 : vector<8x64xf32>
    %69 = arith.divf %67, %68 : vector<8x64xf32>
    %70 = vector.extract_strided_slice %69 {offsets = [0, 0], sizes = [8, 32], strides = [1, 1]} : vector<8x64xf32> to vector<8x32xf32>
    %71 = vector.extract_strided_slice %69 {offsets = [0, 32], sizes = [8, 32], strides = [1, 1]} : vector<8x64xf32> to vector<8x32xf32>
    %72 = vector.extract_strided_slice %63 {offsets = [0, 64], sizes = [8, 32], strides = [1, 1]} : vector<8x128xf32> to vector<8x32xf32>
    %73 = vector.extract_strided_slice %63 {offsets = [0, 96], sizes = [8, 32], strides = [1, 1]} : vector<8x128xf32> to vector<8x32xf32>
    %74 = arith.mulf %70, %73 : vector<8x32xf32>
    %75 = arith.addf %72, %74 : vector<8x32xf32>
    %76 = math.tanh %75 : vector<8x32xf32>
    %cst_19 = arith.constant 1.000000e+00 : f32
    %77 = vector.broadcast %cst_19 : f32 to vector<8x32xf32>
    %78 = arith.subf %77, %71 : vector<8x32xf32>
    %79 = arith.mulf %78, %76 : vector<8x32xf32>
    %80 = arith.mulf %71, %12 : vector<8x32xf32>
    %81 = arith.addf %79, %80 : vector<8x32xf32>
    %82 = tpu.concatenate %62, %81, %12 in 1 : vector<8x32xf32>, vector<8x32xf32>, vector<8x32xf32> -> vector<8x96xf32>
    %c0_20 = arith.constant 0 : index
    %c0_21 = arith.constant 0 : index
    %83 = vector.load %arg2[%c0_20, %c0_21] : memref<96x384xf32, #tpu.memory_space<vmem>>, vector<96x384xf32>
    %cst_22 = arith.constant dense<0.000000e+00> : vector<8x384xf32>
    %84 = tpu.matmul %82, %83, %cst_22 {dimension_numbers = #tpu.dot_dimension_numbers<[1], [0], [0], [1], [0, 0, 1, 1], [], []>} : vector<8x96xf32>, vector<96x384xf32>, vector<8x384xf32> -> vector<8x384xf32>
    %85 = arith.addf %84, %11 : vector<8x384xf32>
    %86 = vector.extract_strided_slice %85 {offsets = [0, 0], sizes = [8, 128], strides = [1, 1]} : vector<8x384xf32> to vector<8x128xf32>
    %87 = vector.extract_strided_slice %8 {offsets = [16, 0], sizes = [8, 128], strides = [1, 1]} : vector<64x128xf32> to vector<8x128xf32>
    %88 = arith.addf %86, %87 : vector<8x128xf32>
    %89 = vector.extract_strided_slice %88 {offsets = [0, 0], sizes = [8, 64], strides = [1, 1]} : vector<8x128xf32> to vector<8x64xf32>
    %90 = arith.negf %89 : vector<8x64xf32>
    %91 = math.exp %90 : vector<8x64xf32>
    %cst_23 = arith.constant 1.000000e+00 : f32
    %92 = vector.broadcast %cst_23 : f32 to vector<8x64xf32>
    %93 = arith.addf %92, %91 : vector<8x64xf32>
    %94 = arith.divf %92, %93 : vector<8x64xf32>
    %95 = vector.extract_strided_slice %94 {offsets = [0, 0], sizes = [8, 32], strides = [1, 1]} : vector<8x64xf32> to vector<8x32xf32>
    %96 = vector.extract_strided_slice %94 {offsets = [0, 32], sizes = [8, 32], strides = [1, 1]} : vector<8x64xf32> to vector<8x32xf32>
    %97 = vector.extract_strided_slice %88 {offsets = [0, 64], sizes = [8, 32], strides = [1, 1]} : vector<8x128xf32> to vector<8x32xf32>
    %98 = vector.extract_strided_slice %88 {offsets = [0, 96], sizes = [8, 32], strides = [1, 1]} : vector<8x128xf32> to vector<8x32xf32>
    %99 = arith.mulf %95, %98 : vector<8x32xf32>
    %100 = arith.addf %97, %99 : vector<8x32xf32>
    %101 = math.tanh %100 : vector<8x32xf32>
    %cst_24 = arith.constant 1.000000e+00 : f32
    %102 = vector.broadcast %cst_24 : f32 to vector<8x32xf32>
    %103 = arith.subf %102, %96 : vector<8x32xf32>
    %104 = arith.mulf %103, %101 : vector<8x32xf32>
    %105 = arith.mulf %96, %62 : vector<8x32xf32>
    %106 = arith.addf %104, %105 : vector<8x32xf32>
    %107 = vector.extract_strided_slice %85 {offsets = [0, 128], sizes = [8, 128], strides = [1, 1]} : vector<8x384xf32> to vector<8x128xf32>
    %108 = vector.extract_strided_slice %107 {offsets = [0, 0], sizes = [8, 64], strides = [1, 1]} : vector<8x128xf32> to vector<8x64xf32>
    %109 = arith.negf %108 : vector<8x64xf32>
    %110 = math.exp %109 : vector<8x64xf32>
    %cst_25 = arith.constant 1.000000e+00 : f32
    %111 = vector.broadcast %cst_25 : f32 to vector<8x64xf32>
    %112 = arith.addf %111, %110 : vector<8x64xf32>
    %113 = arith.divf %111, %112 : vector<8x64xf32>
    %114 = vector.extract_strided_slice %113 {offsets = [0, 0], sizes = [8, 32], strides = [1, 1]} : vector<8x64xf32> to vector<8x32xf32>
    %115 = vector.extract_strided_slice %113 {offsets = [0, 32], sizes = [8, 32], strides = [1, 1]} : vector<8x64xf32> to vector<8x32xf32>
    %116 = vector.extract_strided_slice %107 {offsets = [0, 64], sizes = [8, 32], strides = [1, 1]} : vector<8x128xf32> to vector<8x32xf32>
    %117 = vector.extract_strided_slice %107 {offsets = [0, 96], sizes = [8, 32], strides = [1, 1]} : vector<8x128xf32> to vector<8x32xf32>
    %118 = arith.mulf %114, %117 : vector<8x32xf32>
    %119 = arith.addf %116, %118 : vector<8x32xf32>
    %120 = math.tanh %119 : vector<8x32xf32>
    %cst_26 = arith.constant 1.000000e+00 : f32
    %121 = vector.broadcast %cst_26 : f32 to vector<8x32xf32>
    %122 = arith.subf %121, %115 : vector<8x32xf32>
    %123 = arith.mulf %122, %120 : vector<8x32xf32>
    %124 = arith.mulf %115, %81 : vector<8x32xf32>
    %125 = arith.addf %123, %124 : vector<8x32xf32>
    %126 = vector.extract_strided_slice %85 {offsets = [0, 256], sizes = [8, 128], strides = [1, 1]} : vector<8x384xf32> to vector<8x128xf32>
    %127 = vector.extract_strided_slice %126 {offsets = [0, 0], sizes = [8, 64], strides = [1, 1]} : vector<8x128xf32> to vector<8x64xf32>
    %128 = arith.negf %127 : vector<8x64xf32>
    %129 = math.exp %128 : vector<8x64xf32>
    %cst_27 = arith.constant 1.000000e+00 : f32
    %130 = vector.broadcast %cst_27 : f32 to vector<8x64xf32>
    %131 = arith.addf %130, %129 : vector<8x64xf32>
    %132 = arith.divf %130, %131 : vector<8x64xf32>
    %133 = vector.extract_strided_slice %132 {offsets = [0, 0], sizes = [8, 32], strides = [1, 1]} : vector<8x64xf32> to vector<8x32xf32>
    %134 = vector.extract_strided_slice %132 {offsets = [0, 32], sizes = [8, 32], strides = [1, 1]} : vector<8x64xf32> to vector<8x32xf32>
    %135 = vector.extract_strided_slice %126 {offsets = [0, 64], sizes = [8, 32], strides = [1, 1]} : vector<8x128xf32> to vector<8x32xf32>
    %136 = vector.extract_strided_slice %126 {offsets = [0, 96], sizes = [8, 32], strides = [1, 1]} : vector<8x128xf32> to vector<8x32xf32>
    %137 = arith.mulf %133, %136 : vector<8x32xf32>
    %138 = arith.addf %135, %137 : vector<8x32xf32>
    %139 = math.tanh %138 : vector<8x32xf32>
    %cst_28 = arith.constant 1.000000e+00 : f32
    %140 = vector.broadcast %cst_28 : f32 to vector<8x32xf32>
    %141 = arith.subf %140, %134 : vector<8x32xf32>
    %142 = arith.mulf %141, %139 : vector<8x32xf32>
    %143 = arith.mulf %134, %12 : vector<8x32xf32>
    %144 = arith.addf %142, %143 : vector<8x32xf32>
    %145 = tpu.concatenate %106, %125, %144 in 1 : vector<8x32xf32>, vector<8x32xf32>, vector<8x32xf32> -> vector<8x96xf32>
    %c0_29 = arith.constant 0 : index
    %c0_30 = arith.constant 0 : index
    %146 = vector.load %arg2[%c0_29, %c0_30] : memref<96x384xf32, #tpu.memory_space<vmem>>, vector<96x384xf32>
    %cst_31 = arith.constant dense<0.000000e+00> : vector<8x384xf32>
    %147 = tpu.matmul %145, %146, %cst_31 {dimension_numbers = #tpu.dot_dimension_numbers<[1], [0], [0], [1], [0, 0, 1, 1], [], []>} : vector<8x96xf32>, vector<96x384xf32>, vector<8x384xf32> -> vector<8x384xf32>
    %148 = arith.addf %147, %11 : vector<8x384xf32>
    %149 = vector.extract_strided_slice %148 {offsets = [0, 0], sizes = [8, 128], strides = [1, 1]} : vector<8x384xf32> to vector<8x128xf32>
    %150 = vector.extract_strided_slice %8 {offsets = [24, 0], sizes = [8, 128], strides = [1, 1]} : vector<64x128xf32> to vector<8x128xf32>
    %151 = arith.addf %149, %150 : vector<8x128xf32>
    %152 = vector.extract_strided_slice %151 {offsets = [0, 0], sizes = [8, 64], strides = [1, 1]} : vector<8x128xf32> to vector<8x64xf32>
    %153 = arith.negf %152 : vector<8x64xf32>
    %154 = math.exp %153 : vector<8x64xf32>
    %cst_32 = arith.constant 1.000000e+00 : f32
    %155 = vector.broadcast %cst_32 : f32 to vector<8x64xf32>
    %156 = arith.addf %155, %154 : vector<8x64xf32>
    %157 = arith.divf %155, %156 : vector<8x64xf32>
    %158 = vector.extract_strided_slice %157 {offsets = [0, 0], sizes = [8, 32], strides = [1, 1]} : vector<8x64xf32> to vector<8x32xf32>
    %159 = vector.extract_strided_slice %157 {offsets = [0, 32], sizes = [8, 32], strides = [1, 1]} : vector<8x64xf32> to vector<8x32xf32>
    %160 = vector.extract_strided_slice %151 {offsets = [0, 64], sizes = [8, 32], strides = [1, 1]} : vector<8x128xf32> to vector<8x32xf32>
    %161 = vector.extract_strided_slice %151 {offsets = [0, 96], sizes = [8, 32], strides = [1, 1]} : vector<8x128xf32> to vector<8x32xf32>
    %162 = arith.mulf %158, %161 : vector<8x32xf32>
    %163 = arith.addf %160, %162 : vector<8x32xf32>
    %164 = math.tanh %163 : vector<8x32xf32>
    %cst_33 = arith.constant 1.000000e+00 : f32
    %165 = vector.broadcast %cst_33 : f32 to vector<8x32xf32>
    %166 = arith.subf %165, %159 : vector<8x32xf32>
    %167 = arith.mulf %166, %164 : vector<8x32xf32>
    %168 = arith.mulf %159, %106 : vector<8x32xf32>
    %169 = arith.addf %167, %168 : vector<8x32xf32>
    %170 = vector.extract_strided_slice %148 {offsets = [0, 128], sizes = [8, 128], strides = [1, 1]} : vector<8x384xf32> to vector<8x128xf32>
    %171 = vector.extract_strided_slice %170 {offsets = [0, 0], sizes = [8, 64], strides = [1, 1]} : vector<8x128xf32> to vector<8x64xf32>
    %172 = arith.negf %171 : vector<8x64xf32>
    %173 = math.exp %172 : vector<8x64xf32>
    %cst_34 = arith.constant 1.000000e+00 : f32
    %174 = vector.broadcast %cst_34 : f32 to vector<8x64xf32>
    %175 = arith.addf %174, %173 : vector<8x64xf32>
    %176 = arith.divf %174, %175 : vector<8x64xf32>
    %177 = vector.extract_strided_slice %176 {offsets = [0, 0], sizes = [8, 32], strides = [1, 1]} : vector<8x64xf32> to vector<8x32xf32>
    %178 = vector.extract_strided_slice %176 {offsets = [0, 32], sizes = [8, 32], strides = [1, 1]} : vector<8x64xf32> to vector<8x32xf32>
    %179 = vector.extract_strided_slice %170 {offsets = [0, 64], sizes = [8, 32], strides = [1, 1]} : vector<8x128xf32> to vector<8x32xf32>
    %180 = vector.extract_strided_slice %170 {offsets = [0, 96], sizes = [8, 32], strides = [1, 1]} : vector<8x128xf32> to vector<8x32xf32>
    %181 = arith.mulf %177, %180 : vector<8x32xf32>
    %182 = arith.addf %179, %181 : vector<8x32xf32>
    %183 = math.tanh %182 : vector<8x32xf32>
    %cst_35 = arith.constant 1.000000e+00 : f32
    %184 = vector.broadcast %cst_35 : f32 to vector<8x32xf32>
    %185 = arith.subf %184, %178 : vector<8x32xf32>
    %186 = arith.mulf %185, %183 : vector<8x32xf32>
    %187 = arith.mulf %178, %125 : vector<8x32xf32>
    %188 = arith.addf %186, %187 : vector<8x32xf32>
    %189 = vector.extract_strided_slice %148 {offsets = [0, 256], sizes = [8, 128], strides = [1, 1]} : vector<8x384xf32> to vector<8x128xf32>
    %190 = vector.extract_strided_slice %189 {offsets = [0, 0], sizes = [8, 64], strides = [1, 1]} : vector<8x128xf32> to vector<8x64xf32>
    %191 = arith.negf %190 : vector<8x64xf32>
    %192 = math.exp %191 : vector<8x64xf32>
    %cst_36 = arith.constant 1.000000e+00 : f32
    %193 = vector.broadcast %cst_36 : f32 to vector<8x64xf32>
    %194 = arith.addf %193, %192 : vector<8x64xf32>
    %195 = arith.divf %193, %194 : vector<8x64xf32>
    %196 = vector.extract_strided_slice %195 {offsets = [0, 0], sizes = [8, 32], strides = [1, 1]} : vector<8x64xf32> to vector<8x32xf32>
    %197 = vector.extract_strided_slice %195 {offsets = [0, 32], sizes = [8, 32], strides = [1, 1]} : vector<8x64xf32> to vector<8x32xf32>
    %198 = vector.extract_strided_slice %189 {offsets = [0, 64], sizes = [8, 32], strides = [1, 1]} : vector<8x128xf32> to vector<8x32xf32>
    %199 = vector.extract_strided_slice %189 {offsets = [0, 96], sizes = [8, 32], strides = [1, 1]} : vector<8x128xf32> to vector<8x32xf32>
    %200 = arith.mulf %196, %199 : vector<8x32xf32>
    %201 = arith.addf %198, %200 : vector<8x32xf32>
    %202 = math.tanh %201 : vector<8x32xf32>
    %cst_37 = arith.constant 1.000000e+00 : f32
    %203 = vector.broadcast %cst_37 : f32 to vector<8x32xf32>
    %204 = arith.subf %203, %197 : vector<8x32xf32>
    %205 = arith.mulf %204, %202 : vector<8x32xf32>
    %206 = arith.mulf %197, %144 : vector<8x32xf32>
    %207 = arith.addf %205, %206 : vector<8x32xf32>
    %208 = tpu.concatenate %169, %188, %207 in 1 : vector<8x32xf32>, vector<8x32xf32>, vector<8x32xf32> -> vector<8x96xf32>
    %c0_38 = arith.constant 0 : index
    %c0_39 = arith.constant 0 : index
    %209 = vector.load %arg2[%c0_38, %c0_39] : memref<96x384xf32, #tpu.memory_space<vmem>>, vector<96x384xf32>
    %cst_40 = arith.constant dense<0.000000e+00> : vector<8x384xf32>
    %210 = tpu.matmul %208, %209, %cst_40 {dimension_numbers = #tpu.dot_dimension_numbers<[1], [0], [0], [1], [0, 0, 1, 1], [], []>} : vector<8x96xf32>, vector<96x384xf32>, vector<8x384xf32> -> vector<8x384xf32>
    %211 = arith.addf %210, %11 : vector<8x384xf32>
    %212 = vector.extract_strided_slice %211 {offsets = [0, 0], sizes = [8, 128], strides = [1, 1]} : vector<8x384xf32> to vector<8x128xf32>
    %213 = vector.extract_strided_slice %8 {offsets = [32, 0], sizes = [8, 128], strides = [1, 1]} : vector<64x128xf32> to vector<8x128xf32>
    %214 = arith.addf %212, %213 : vector<8x128xf32>
    %215 = vector.extract_strided_slice %214 {offsets = [0, 0], sizes = [8, 64], strides = [1, 1]} : vector<8x128xf32> to vector<8x64xf32>
    %216 = arith.negf %215 : vector<8x64xf32>
    %217 = math.exp %216 : vector<8x64xf32>
    %cst_41 = arith.constant 1.000000e+00 : f32
    %218 = vector.broadcast %cst_41 : f32 to vector<8x64xf32>
    %219 = arith.addf %218, %217 : vector<8x64xf32>
    %220 = arith.divf %218, %219 : vector<8x64xf32>
    %221 = vector.extract_strided_slice %220 {offsets = [0, 0], sizes = [8, 32], strides = [1, 1]} : vector<8x64xf32> to vector<8x32xf32>
    %222 = vector.extract_strided_slice %220 {offsets = [0, 32], sizes = [8, 32], strides = [1, 1]} : vector<8x64xf32> to vector<8x32xf32>
    %223 = vector.extract_strided_slice %214 {offsets = [0, 64], sizes = [8, 32], strides = [1, 1]} : vector<8x128xf32> to vector<8x32xf32>
    %224 = vector.extract_strided_slice %214 {offsets = [0, 96], sizes = [8, 32], strides = [1, 1]} : vector<8x128xf32> to vector<8x32xf32>
    %225 = arith.mulf %221, %224 : vector<8x32xf32>
    %226 = arith.addf %223, %225 : vector<8x32xf32>
    %227 = math.tanh %226 : vector<8x32xf32>
    %cst_42 = arith.constant 1.000000e+00 : f32
    %228 = vector.broadcast %cst_42 : f32 to vector<8x32xf32>
    %229 = arith.subf %228, %222 : vector<8x32xf32>
    %230 = arith.mulf %229, %227 : vector<8x32xf32>
    %231 = arith.mulf %222, %169 : vector<8x32xf32>
    %232 = arith.addf %230, %231 : vector<8x32xf32>
    %233 = vector.extract_strided_slice %211 {offsets = [0, 128], sizes = [8, 128], strides = [1, 1]} : vector<8x384xf32> to vector<8x128xf32>
    %234 = vector.extract_strided_slice %233 {offsets = [0, 0], sizes = [8, 64], strides = [1, 1]} : vector<8x128xf32> to vector<8x64xf32>
    %235 = arith.negf %234 : vector<8x64xf32>
    %236 = math.exp %235 : vector<8x64xf32>
    %cst_43 = arith.constant 1.000000e+00 : f32
    %237 = vector.broadcast %cst_43 : f32 to vector<8x64xf32>
    %238 = arith.addf %237, %236 : vector<8x64xf32>
    %239 = arith.divf %237, %238 : vector<8x64xf32>
    %240 = vector.extract_strided_slice %239 {offsets = [0, 0], sizes = [8, 32], strides = [1, 1]} : vector<8x64xf32> to vector<8x32xf32>
    %241 = vector.extract_strided_slice %239 {offsets = [0, 32], sizes = [8, 32], strides = [1, 1]} : vector<8x64xf32> to vector<8x32xf32>
    %242 = vector.extract_strided_slice %233 {offsets = [0, 64], sizes = [8, 32], strides = [1, 1]} : vector<8x128xf32> to vector<8x32xf32>
    %243 = vector.extract_strided_slice %233 {offsets = [0, 96], sizes = [8, 32], strides = [1, 1]} : vector<8x128xf32> to vector<8x32xf32>
    %244 = arith.mulf %240, %243 : vector<8x32xf32>
    %245 = arith.addf %242, %244 : vector<8x32xf32>
    %246 = math.tanh %245 : vector<8x32xf32>
    %cst_44 = arith.constant 1.000000e+00 : f32
    %247 = vector.broadcast %cst_44 : f32 to vector<8x32xf32>
    %248 = arith.subf %247, %241 : vector<8x32xf32>
    %249 = arith.mulf %248, %246 : vector<8x32xf32>
    %250 = arith.mulf %241, %188 : vector<8x32xf32>
    %251 = arith.addf %249, %250 : vector<8x32xf32>
    %252 = vector.extract_strided_slice %211 {offsets = [0, 256], sizes = [8, 128], strides = [1, 1]} : vector<8x384xf32> to vector<8x128xf32>
    %253 = vector.extract_strided_slice %252 {offsets = [0, 0], sizes = [8, 64], strides = [1, 1]} : vector<8x128xf32> to vector<8x64xf32>
    %254 = arith.negf %253 : vector<8x64xf32>
    %255 = math.exp %254 : vector<8x64xf32>
    %cst_45 = arith.constant 1.000000e+00 : f32
    %256 = vector.broadcast %cst_45 : f32 to vector<8x64xf32>
    %257 = arith.addf %256, %255 : vector<8x64xf32>
    %258 = arith.divf %256, %257 : vector<8x64xf32>
    %259 = vector.extract_strided_slice %258 {offsets = [0, 0], sizes = [8, 32], strides = [1, 1]} : vector<8x64xf32> to vector<8x32xf32>
    %260 = vector.extract_strided_slice %258 {offsets = [0, 32], sizes = [8, 32], strides = [1, 1]} : vector<8x64xf32> to vector<8x32xf32>
    %261 = vector.extract_strided_slice %252 {offsets = [0, 64], sizes = [8, 32], strides = [1, 1]} : vector<8x128xf32> to vector<8x32xf32>
    %262 = vector.extract_strided_slice %252 {offsets = [0, 96], sizes = [8, 32], strides = [1, 1]} : vector<8x128xf32> to vector<8x32xf32>
    %263 = arith.mulf %259, %262 : vector<8x32xf32>
    %264 = arith.addf %261, %263 : vector<8x32xf32>
    %265 = math.tanh %264 : vector<8x32xf32>
    %cst_46 = arith.constant 1.000000e+00 : f32
    %266 = vector.broadcast %cst_46 : f32 to vector<8x32xf32>
    %267 = arith.subf %266, %260 : vector<8x32xf32>
    %268 = arith.mulf %267, %265 : vector<8x32xf32>
    %269 = arith.mulf %260, %207 : vector<8x32xf32>
    %270 = arith.addf %268, %269 : vector<8x32xf32>
    %271 = tpu.concatenate %232, %251, %270 in 1 : vector<8x32xf32>, vector<8x32xf32>, vector<8x32xf32> -> vector<8x96xf32>
    %c0_47 = arith.constant 0 : index
    %c0_48 = arith.constant 0 : index
    %272 = vector.load %arg2[%c0_47, %c0_48] : memref<96x384xf32, #tpu.memory_space<vmem>>, vector<96x384xf32>
    %cst_49 = arith.constant dense<0.000000e+00> : vector<8x384xf32>
    %273 = tpu.matmul %271, %272, %cst_49 {dimension_numbers = #tpu.dot_dimension_numbers<[1], [0], [0], [1], [0, 0, 1, 1], [], []>} : vector<8x96xf32>, vector<96x384xf32>, vector<8x384xf32> -> vector<8x384xf32>
    %274 = arith.addf %273, %11 : vector<8x384xf32>
    %275 = vector.extract_strided_slice %274 {offsets = [0, 0], sizes = [8, 128], strides = [1, 1]} : vector<8x384xf32> to vector<8x128xf32>
    %276 = vector.extract_strided_slice %8 {offsets = [40, 0], sizes = [8, 128], strides = [1, 1]} : vector<64x128xf32> to vector<8x128xf32>
    %277 = arith.addf %275, %276 : vector<8x128xf32>
    %278 = vector.extract_strided_slice %277 {offsets = [0, 0], sizes = [8, 64], strides = [1, 1]} : vector<8x128xf32> to vector<8x64xf32>
    %279 = arith.negf %278 : vector<8x64xf32>
    %280 = math.exp %279 : vector<8x64xf32>
    %cst_50 = arith.constant 1.000000e+00 : f32
    %281 = vector.broadcast %cst_50 : f32 to vector<8x64xf32>
    %282 = arith.addf %281, %280 : vector<8x64xf32>
    %283 = arith.divf %281, %282 : vector<8x64xf32>
    %284 = vector.extract_strided_slice %283 {offsets = [0, 0], sizes = [8, 32], strides = [1, 1]} : vector<8x64xf32> to vector<8x32xf32>
    %285 = vector.extract_strided_slice %283 {offsets = [0, 32], sizes = [8, 32], strides = [1, 1]} : vector<8x64xf32> to vector<8x32xf32>
    %286 = vector.extract_strided_slice %277 {offsets = [0, 64], sizes = [8, 32], strides = [1, 1]} : vector<8x128xf32> to vector<8x32xf32>
    %287 = vector.extract_strided_slice %277 {offsets = [0, 96], sizes = [8, 32], strides = [1, 1]} : vector<8x128xf32> to vector<8x32xf32>
    %288 = arith.mulf %284, %287 : vector<8x32xf32>
    %289 = arith.addf %286, %288 : vector<8x32xf32>
    %290 = math.tanh %289 : vector<8x32xf32>
    %cst_51 = arith.constant 1.000000e+00 : f32
    %291 = vector.broadcast %cst_51 : f32 to vector<8x32xf32>
    %292 = arith.subf %291, %285 : vector<8x32xf32>
    %293 = arith.mulf %292, %290 : vector<8x32xf32>
    %294 = arith.mulf %285, %232 : vector<8x32xf32>
    %295 = arith.addf %293, %294 : vector<8x32xf32>
    %296 = vector.extract_strided_slice %274 {offsets = [0, 128], sizes = [8, 128], strides = [1, 1]} : vector<8x384xf32> to vector<8x128xf32>
    %297 = vector.extract_strided_slice %296 {offsets = [0, 0], sizes = [8, 64], strides = [1, 1]} : vector<8x128xf32> to vector<8x64xf32>
    %298 = arith.negf %297 : vector<8x64xf32>
    %299 = math.exp %298 : vector<8x64xf32>
    %cst_52 = arith.constant 1.000000e+00 : f32
    %300 = vector.broadcast %cst_52 : f32 to vector<8x64xf32>
    %301 = arith.addf %300, %299 : vector<8x64xf32>
    %302 = arith.divf %300, %301 : vector<8x64xf32>
    %303 = vector.extract_strided_slice %302 {offsets = [0, 0], sizes = [8, 32], strides = [1, 1]} : vector<8x64xf32> to vector<8x32xf32>
    %304 = vector.extract_strided_slice %302 {offsets = [0, 32], sizes = [8, 32], strides = [1, 1]} : vector<8x64xf32> to vector<8x32xf32>
    %305 = vector.extract_strided_slice %296 {offsets = [0, 64], sizes = [8, 32], strides = [1, 1]} : vector<8x128xf32> to vector<8x32xf32>
    %306 = vector.extract_strided_slice %296 {offsets = [0, 96], sizes = [8, 32], strides = [1, 1]} : vector<8x128xf32> to vector<8x32xf32>
    %307 = arith.mulf %303, %306 : vector<8x32xf32>
    %308 = arith.addf %305, %307 : vector<8x32xf32>
    %309 = math.tanh %308 : vector<8x32xf32>
    %cst_53 = arith.constant 1.000000e+00 : f32
    %310 = vector.broadcast %cst_53 : f32 to vector<8x32xf32>
    %311 = arith.subf %310, %304 : vector<8x32xf32>
    %312 = arith.mulf %311, %309 : vector<8x32xf32>
    %313 = arith.mulf %304, %251 : vector<8x32xf32>
    %314 = arith.addf %312, %313 : vector<8x32xf32>
    %315 = vector.extract_strided_slice %274 {offsets = [0, 256], sizes = [8, 128], strides = [1, 1]} : vector<8x384xf32> to vector<8x128xf32>
    %316 = vector.extract_strided_slice %315 {offsets = [0, 0], sizes = [8, 64], strides = [1, 1]} : vector<8x128xf32> to vector<8x64xf32>
    %317 = arith.negf %316 : vector<8x64xf32>
    %318 = math.exp %317 : vector<8x64xf32>
    %cst_54 = arith.constant 1.000000e+00 : f32
    %319 = vector.broadcast %cst_54 : f32 to vector<8x64xf32>
    %320 = arith.addf %319, %318 : vector<8x64xf32>
    %321 = arith.divf %319, %320 : vector<8x64xf32>
    %322 = vector.extract_strided_slice %321 {offsets = [0, 0], sizes = [8, 32], strides = [1, 1]} : vector<8x64xf32> to vector<8x32xf32>
    %323 = vector.extract_strided_slice %321 {offsets = [0, 32], sizes = [8, 32], strides = [1, 1]} : vector<8x64xf32> to vector<8x32xf32>
    %324 = vector.extract_strided_slice %315 {offsets = [0, 64], sizes = [8, 32], strides = [1, 1]} : vector<8x128xf32> to vector<8x32xf32>
    %325 = vector.extract_strided_slice %315 {offsets = [0, 96], sizes = [8, 32], strides = [1, 1]} : vector<8x128xf32> to vector<8x32xf32>
    %326 = arith.mulf %322, %325 : vector<8x32xf32>
    %327 = arith.addf %324, %326 : vector<8x32xf32>
    %328 = math.tanh %327 : vector<8x32xf32>
    %cst_55 = arith.constant 1.000000e+00 : f32
    %329 = vector.broadcast %cst_55 : f32 to vector<8x32xf32>
    %330 = arith.subf %329, %323 : vector<8x32xf32>
    %331 = arith.mulf %330, %328 : vector<8x32xf32>
    %332 = arith.mulf %323, %270 : vector<8x32xf32>
    %333 = arith.addf %331, %332 : vector<8x32xf32>
    %334 = tpu.concatenate %295, %314, %333 in 1 : vector<8x32xf32>, vector<8x32xf32>, vector<8x32xf32> -> vector<8x96xf32>
    %c0_56 = arith.constant 0 : index
    %c0_57 = arith.constant 0 : index
    %335 = vector.load %arg2[%c0_56, %c0_57] : memref<96x384xf32, #tpu.memory_space<vmem>>, vector<96x384xf32>
    %cst_58 = arith.constant dense<0.000000e+00> : vector<8x384xf32>
    %336 = tpu.matmul %334, %335, %cst_58 {dimension_numbers = #tpu.dot_dimension_numbers<[1], [0], [0], [1], [0, 0, 1, 1], [], []>} : vector<8x96xf32>, vector<96x384xf32>, vector<8x384xf32> -> vector<8x384xf32>
    %337 = arith.addf %336, %11 : vector<8x384xf32>
    %338 = vector.extract_strided_slice %337 {offsets = [0, 0], sizes = [8, 128], strides = [1, 1]} : vector<8x384xf32> to vector<8x128xf32>
    %339 = vector.extract_strided_slice %8 {offsets = [48, 0], sizes = [8, 128], strides = [1, 1]} : vector<64x128xf32> to vector<8x128xf32>
    %340 = arith.addf %338, %339 : vector<8x128xf32>
    %341 = vector.extract_strided_slice %340 {offsets = [0, 0], sizes = [8, 64], strides = [1, 1]} : vector<8x128xf32> to vector<8x64xf32>
    %342 = arith.negf %341 : vector<8x64xf32>
    %343 = math.exp %342 : vector<8x64xf32>
    %cst_59 = arith.constant 1.000000e+00 : f32
    %344 = vector.broadcast %cst_59 : f32 to vector<8x64xf32>
    %345 = arith.addf %344, %343 : vector<8x64xf32>
    %346 = arith.divf %344, %345 : vector<8x64xf32>
    %347 = vector.extract_strided_slice %346 {offsets = [0, 0], sizes = [8, 32], strides = [1, 1]} : vector<8x64xf32> to vector<8x32xf32>
    %348 = vector.extract_strided_slice %346 {offsets = [0, 32], sizes = [8, 32], strides = [1, 1]} : vector<8x64xf32> to vector<8x32xf32>
    %349 = vector.extract_strided_slice %340 {offsets = [0, 64], sizes = [8, 32], strides = [1, 1]} : vector<8x128xf32> to vector<8x32xf32>
    %350 = vector.extract_strided_slice %340 {offsets = [0, 96], sizes = [8, 32], strides = [1, 1]} : vector<8x128xf32> to vector<8x32xf32>
    %351 = arith.mulf %347, %350 : vector<8x32xf32>
    %352 = arith.addf %349, %351 : vector<8x32xf32>
    %353 = math.tanh %352 : vector<8x32xf32>
    %cst_60 = arith.constant 1.000000e+00 : f32
    %354 = vector.broadcast %cst_60 : f32 to vector<8x32xf32>
    %355 = arith.subf %354, %348 : vector<8x32xf32>
    %356 = arith.mulf %355, %353 : vector<8x32xf32>
    %357 = arith.mulf %348, %295 : vector<8x32xf32>
    %358 = arith.addf %356, %357 : vector<8x32xf32>
    %359 = vector.extract_strided_slice %337 {offsets = [0, 128], sizes = [8, 128], strides = [1, 1]} : vector<8x384xf32> to vector<8x128xf32>
    %360 = vector.extract_strided_slice %359 {offsets = [0, 0], sizes = [8, 64], strides = [1, 1]} : vector<8x128xf32> to vector<8x64xf32>
    %361 = arith.negf %360 : vector<8x64xf32>
    %362 = math.exp %361 : vector<8x64xf32>
    %cst_61 = arith.constant 1.000000e+00 : f32
    %363 = vector.broadcast %cst_61 : f32 to vector<8x64xf32>
    %364 = arith.addf %363, %362 : vector<8x64xf32>
    %365 = arith.divf %363, %364 : vector<8x64xf32>
    %366 = vector.extract_strided_slice %365 {offsets = [0, 0], sizes = [8, 32], strides = [1, 1]} : vector<8x64xf32> to vector<8x32xf32>
    %367 = vector.extract_strided_slice %365 {offsets = [0, 32], sizes = [8, 32], strides = [1, 1]} : vector<8x64xf32> to vector<8x32xf32>
    %368 = vector.extract_strided_slice %359 {offsets = [0, 64], sizes = [8, 32], strides = [1, 1]} : vector<8x128xf32> to vector<8x32xf32>
    %369 = vector.extract_strided_slice %359 {offsets = [0, 96], sizes = [8, 32], strides = [1, 1]} : vector<8x128xf32> to vector<8x32xf32>
    %370 = arith.mulf %366, %369 : vector<8x32xf32>
    %371 = arith.addf %368, %370 : vector<8x32xf32>
    %372 = math.tanh %371 : vector<8x32xf32>
    %cst_62 = arith.constant 1.000000e+00 : f32
    %373 = vector.broadcast %cst_62 : f32 to vector<8x32xf32>
    %374 = arith.subf %373, %367 : vector<8x32xf32>
    %375 = arith.mulf %374, %372 : vector<8x32xf32>
    %376 = arith.mulf %367, %314 : vector<8x32xf32>
    %377 = arith.addf %375, %376 : vector<8x32xf32>
    %378 = vector.extract_strided_slice %337 {offsets = [0, 256], sizes = [8, 128], strides = [1, 1]} : vector<8x384xf32> to vector<8x128xf32>
    %379 = vector.extract_strided_slice %378 {offsets = [0, 0], sizes = [8, 64], strides = [1, 1]} : vector<8x128xf32> to vector<8x64xf32>
    %380 = arith.negf %379 : vector<8x64xf32>
    %381 = math.exp %380 : vector<8x64xf32>
    %cst_63 = arith.constant 1.000000e+00 : f32
    %382 = vector.broadcast %cst_63 : f32 to vector<8x64xf32>
    %383 = arith.addf %382, %381 : vector<8x64xf32>
    %384 = arith.divf %382, %383 : vector<8x64xf32>
    %385 = vector.extract_strided_slice %384 {offsets = [0, 0], sizes = [8, 32], strides = [1, 1]} : vector<8x64xf32> to vector<8x32xf32>
    %386 = vector.extract_strided_slice %384 {offsets = [0, 32], sizes = [8, 32], strides = [1, 1]} : vector<8x64xf32> to vector<8x32xf32>
    %387 = vector.extract_strided_slice %378 {offsets = [0, 64], sizes = [8, 32], strides = [1, 1]} : vector<8x128xf32> to vector<8x32xf32>
    %388 = vector.extract_strided_slice %378 {offsets = [0, 96], sizes = [8, 32], strides = [1, 1]} : vector<8x128xf32> to vector<8x32xf32>
    %389 = arith.mulf %385, %388 : vector<8x32xf32>
    %390 = arith.addf %387, %389 : vector<8x32xf32>
    %391 = math.tanh %390 : vector<8x32xf32>
    %cst_64 = arith.constant 1.000000e+00 : f32
    %392 = vector.broadcast %cst_64 : f32 to vector<8x32xf32>
    %393 = arith.subf %392, %386 : vector<8x32xf32>
    %394 = arith.mulf %393, %391 : vector<8x32xf32>
    %395 = arith.mulf %386, %333 : vector<8x32xf32>
    %396 = arith.addf %394, %395 : vector<8x32xf32>
    %397 = tpu.concatenate %358, %377, %396 in 1 : vector<8x32xf32>, vector<8x32xf32>, vector<8x32xf32> -> vector<8x96xf32>
    %c0_65 = arith.constant 0 : index
    %c0_66 = arith.constant 0 : index
    %398 = vector.load %arg2[%c0_65, %c0_66] : memref<96x384xf32, #tpu.memory_space<vmem>>, vector<96x384xf32>
    %cst_67 = arith.constant dense<0.000000e+00> : vector<8x384xf32>
    %399 = tpu.matmul %397, %398, %cst_67 {dimension_numbers = #tpu.dot_dimension_numbers<[1], [0], [0], [1], [0, 0, 1, 1], [], []>} : vector<8x96xf32>, vector<96x384xf32>, vector<8x384xf32> -> vector<8x384xf32>
    %400 = arith.addf %399, %11 : vector<8x384xf32>
    %401 = vector.extract_strided_slice %400 {offsets = [0, 0], sizes = [8, 128], strides = [1, 1]} : vector<8x384xf32> to vector<8x128xf32>
    %402 = vector.extract_strided_slice %8 {offsets = [56, 0], sizes = [8, 128], strides = [1, 1]} : vector<64x128xf32> to vector<8x128xf32>
    %403 = arith.addf %401, %402 : vector<8x128xf32>
    %404 = vector.extract_strided_slice %403 {offsets = [0, 0], sizes = [8, 64], strides = [1, 1]} : vector<8x128xf32> to vector<8x64xf32>
    %405 = arith.negf %404 : vector<8x64xf32>
    %406 = math.exp %405 : vector<8x64xf32>
    %cst_68 = arith.constant 1.000000e+00 : f32
    %407 = vector.broadcast %cst_68 : f32 to vector<8x64xf32>
    %408 = arith.addf %407, %406 : vector<8x64xf32>
    %409 = arith.divf %407, %408 : vector<8x64xf32>
    %410 = vector.extract_strided_slice %409 {offsets = [0, 0], sizes = [8, 32], strides = [1, 1]} : vector<8x64xf32> to vector<8x32xf32>
    %411 = vector.extract_strided_slice %409 {offsets = [0, 32], sizes = [8, 32], strides = [1, 1]} : vector<8x64xf32> to vector<8x32xf32>
    %412 = vector.extract_strided_slice %403 {offsets = [0, 64], sizes = [8, 32], strides = [1, 1]} : vector<8x128xf32> to vector<8x32xf32>
    %413 = vector.extract_strided_slice %403 {offsets = [0, 96], sizes = [8, 32], strides = [1, 1]} : vector<8x128xf32> to vector<8x32xf32>
    %414 = arith.mulf %410, %413 : vector<8x32xf32>
    %415 = arith.addf %412, %414 : vector<8x32xf32>
    %416 = math.tanh %415 : vector<8x32xf32>
    %cst_69 = arith.constant 1.000000e+00 : f32
    %417 = vector.broadcast %cst_69 : f32 to vector<8x32xf32>
    %418 = arith.subf %417, %411 : vector<8x32xf32>
    %419 = arith.mulf %418, %416 : vector<8x32xf32>
    %420 = arith.mulf %411, %358 : vector<8x32xf32>
    %421 = arith.addf %419, %420 : vector<8x32xf32>
    %422 = vector.extract_strided_slice %400 {offsets = [0, 128], sizes = [8, 128], strides = [1, 1]} : vector<8x384xf32> to vector<8x128xf32>
    %423 = vector.extract_strided_slice %422 {offsets = [0, 0], sizes = [8, 64], strides = [1, 1]} : vector<8x128xf32> to vector<8x64xf32>
    %424 = arith.negf %423 : vector<8x64xf32>
    %425 = math.exp %424 : vector<8x64xf32>
    %cst_70 = arith.constant 1.000000e+00 : f32
    %426 = vector.broadcast %cst_70 : f32 to vector<8x64xf32>
    %427 = arith.addf %426, %425 : vector<8x64xf32>
    %428 = arith.divf %426, %427 : vector<8x64xf32>
    %429 = vector.extract_strided_slice %428 {offsets = [0, 0], sizes = [8, 32], strides = [1, 1]} : vector<8x64xf32> to vector<8x32xf32>
    %430 = vector.extract_strided_slice %428 {offsets = [0, 32], sizes = [8, 32], strides = [1, 1]} : vector<8x64xf32> to vector<8x32xf32>
    %431 = vector.extract_strided_slice %422 {offsets = [0, 64], sizes = [8, 32], strides = [1, 1]} : vector<8x128xf32> to vector<8x32xf32>
    %432 = vector.extract_strided_slice %422 {offsets = [0, 96], sizes = [8, 32], strides = [1, 1]} : vector<8x128xf32> to vector<8x32xf32>
    %433 = arith.mulf %429, %432 : vector<8x32xf32>
    %434 = arith.addf %431, %433 : vector<8x32xf32>
    %435 = math.tanh %434 : vector<8x32xf32>
    %cst_71 = arith.constant 1.000000e+00 : f32
    %436 = vector.broadcast %cst_71 : f32 to vector<8x32xf32>
    %437 = arith.subf %436, %430 : vector<8x32xf32>
    %438 = arith.mulf %437, %435 : vector<8x32xf32>
    %439 = arith.mulf %430, %377 : vector<8x32xf32>
    %440 = arith.addf %438, %439 : vector<8x32xf32>
    %441 = vector.extract_strided_slice %400 {offsets = [0, 256], sizes = [8, 128], strides = [1, 1]} : vector<8x384xf32> to vector<8x128xf32>
    %442 = vector.extract_strided_slice %441 {offsets = [0, 0], sizes = [8, 64], strides = [1, 1]} : vector<8x128xf32> to vector<8x64xf32>
    %443 = arith.negf %442 : vector<8x64xf32>
    %444 = math.exp %443 : vector<8x64xf32>
    %cst_72 = arith.constant 1.000000e+00 : f32
    %445 = vector.broadcast %cst_72 : f32 to vector<8x64xf32>
    %446 = arith.addf %445, %444 : vector<8x64xf32>
    %447 = arith.divf %445, %446 : vector<8x64xf32>
    %448 = vector.extract_strided_slice %447 {offsets = [0, 0], sizes = [8, 32], strides = [1, 1]} : vector<8x64xf32> to vector<8x32xf32>
    %449 = vector.extract_strided_slice %447 {offsets = [0, 32], sizes = [8, 32], strides = [1, 1]} : vector<8x64xf32> to vector<8x32xf32>
    %450 = vector.extract_strided_slice %441 {offsets = [0, 64], sizes = [8, 32], strides = [1, 1]} : vector<8x128xf32> to vector<8x32xf32>
    %451 = vector.extract_strided_slice %441 {offsets = [0, 96], sizes = [8, 32], strides = [1, 1]} : vector<8x128xf32> to vector<8x32xf32>
    %452 = arith.mulf %448, %451 : vector<8x32xf32>
    %453 = arith.addf %450, %452 : vector<8x32xf32>
    %454 = math.tanh %453 : vector<8x32xf32>
    %cst_73 = arith.constant 1.000000e+00 : f32
    %455 = vector.broadcast %cst_73 : f32 to vector<8x32xf32>
    %456 = arith.subf %455, %449 : vector<8x32xf32>
    %457 = arith.mulf %456, %454 : vector<8x32xf32>
    %458 = arith.mulf %449, %396 : vector<8x32xf32>
    %459 = arith.addf %457, %458 : vector<8x32xf32>
    %460 = tpu.concatenate %421, %440, %459 in 1 : vector<8x32xf32>, vector<8x32xf32>, vector<8x32xf32> -> vector<8x96xf32>
    %c0_74 = arith.constant 0 : index
    %c0_75 = arith.constant 0 : index
    %461 = vector.load %arg2[%c0_74, %c0_75] : memref<96x384xf32, #tpu.memory_space<vmem>>, vector<96x384xf32>
    %cst_76 = arith.constant dense<0.000000e+00> : vector<8x384xf32>
    %462 = tpu.matmul %460, %461, %cst_76 {dimension_numbers = #tpu.dot_dimension_numbers<[1], [0], [0], [1], [0, 0, 1, 1], [], []>} : vector<8x96xf32>, vector<96x384xf32>, vector<8x384xf32> -> vector<8x384xf32>
    %463 = arith.addf %462, %11 : vector<8x384xf32>
    %464 = vector.extract_strided_slice %463 {offsets = [0, 128], sizes = [8, 128], strides = [1, 1]} : vector<8x384xf32> to vector<8x128xf32>
    %465 = vector.extract_strided_slice %464 {offsets = [0, 0], sizes = [8, 64], strides = [1, 1]} : vector<8x128xf32> to vector<8x64xf32>
    %466 = arith.negf %465 : vector<8x64xf32>
    %467 = math.exp %466 : vector<8x64xf32>
    %cst_77 = arith.constant 1.000000e+00 : f32
    %468 = vector.broadcast %cst_77 : f32 to vector<8x64xf32>
    %469 = arith.addf %468, %467 : vector<8x64xf32>
    %470 = arith.divf %468, %469 : vector<8x64xf32>
    %471 = vector.extract_strided_slice %470 {offsets = [0, 0], sizes = [8, 32], strides = [1, 1]} : vector<8x64xf32> to vector<8x32xf32>
    %472 = vector.extract_strided_slice %470 {offsets = [0, 32], sizes = [8, 32], strides = [1, 1]} : vector<8x64xf32> to vector<8x32xf32>
    %473 = vector.extract_strided_slice %464 {offsets = [0, 64], sizes = [8, 32], strides = [1, 1]} : vector<8x128xf32> to vector<8x32xf32>
    %474 = vector.extract_strided_slice %464 {offsets = [0, 96], sizes = [8, 32], strides = [1, 1]} : vector<8x128xf32> to vector<8x32xf32>
    %475 = arith.mulf %471, %474 : vector<8x32xf32>
    %476 = arith.addf %473, %475 : vector<8x32xf32>
    %477 = math.tanh %476 : vector<8x32xf32>
    %cst_78 = arith.constant 1.000000e+00 : f32
    %478 = vector.broadcast %cst_78 : f32 to vector<8x32xf32>
    %479 = arith.subf %478, %472 : vector<8x32xf32>
    %480 = arith.mulf %479, %477 : vector<8x32xf32>
    %481 = arith.mulf %472, %440 : vector<8x32xf32>
    %482 = arith.addf %480, %481 : vector<8x32xf32>
    %483 = vector.extract_strided_slice %463 {offsets = [0, 256], sizes = [8, 128], strides = [1, 1]} : vector<8x384xf32> to vector<8x128xf32>
    %484 = vector.extract_strided_slice %483 {offsets = [0, 0], sizes = [8, 64], strides = [1, 1]} : vector<8x128xf32> to vector<8x64xf32>
    %485 = arith.negf %484 : vector<8x64xf32>
    %486 = math.exp %485 : vector<8x64xf32>
    %cst_79 = arith.constant 1.000000e+00 : f32
    %487 = vector.broadcast %cst_79 : f32 to vector<8x64xf32>
    %488 = arith.addf %487, %486 : vector<8x64xf32>
    %489 = arith.divf %487, %488 : vector<8x64xf32>
    %490 = vector.extract_strided_slice %489 {offsets = [0, 0], sizes = [8, 32], strides = [1, 1]} : vector<8x64xf32> to vector<8x32xf32>
    %491 = vector.extract_strided_slice %489 {offsets = [0, 32], sizes = [8, 32], strides = [1, 1]} : vector<8x64xf32> to vector<8x32xf32>
    %492 = vector.extract_strided_slice %483 {offsets = [0, 64], sizes = [8, 32], strides = [1, 1]} : vector<8x128xf32> to vector<8x32xf32>
    %493 = vector.extract_strided_slice %483 {offsets = [0, 96], sizes = [8, 32], strides = [1, 1]} : vector<8x128xf32> to vector<8x32xf32>
    %494 = arith.mulf %490, %493 : vector<8x32xf32>
    %495 = arith.addf %492, %494 : vector<8x32xf32>
    %496 = math.tanh %495 : vector<8x32xf32>
    %cst_80 = arith.constant 1.000000e+00 : f32
    %497 = vector.broadcast %cst_80 : f32 to vector<8x32xf32>
    %498 = arith.subf %497, %491 : vector<8x32xf32>
    %499 = arith.mulf %498, %496 : vector<8x32xf32>
    %500 = arith.mulf %491, %459 : vector<8x32xf32>
    %501 = arith.addf %499, %500 : vector<8x32xf32>
    %502 = tpu.concatenate %421, %482, %501 in 1 : vector<8x32xf32>, vector<8x32xf32>, vector<8x32xf32> -> vector<8x96xf32>
    %c0_81 = arith.constant 0 : index
    %c0_82 = arith.constant 0 : index
    %503 = vector.load %arg2[%c0_81, %c0_82] : memref<96x384xf32, #tpu.memory_space<vmem>>, vector<96x384xf32>
    %cst_83 = arith.constant dense<0.000000e+00> : vector<8x384xf32>
    %504 = tpu.matmul %502, %503, %cst_83 {dimension_numbers = #tpu.dot_dimension_numbers<[1], [0], [0], [1], [0, 0, 1, 1], [], []>} : vector<8x96xf32>, vector<96x384xf32>, vector<8x384xf32> -> vector<8x384xf32>
    %505 = arith.addf %504, %11 : vector<8x384xf32>
    %506 = vector.extract_strided_slice %505 {offsets = [0, 256], sizes = [8, 128], strides = [1, 1]} : vector<8x384xf32> to vector<8x128xf32>
    %507 = vector.extract_strided_slice %506 {offsets = [0, 0], sizes = [8, 64], strides = [1, 1]} : vector<8x128xf32> to vector<8x64xf32>
    %508 = arith.negf %507 : vector<8x64xf32>
    %509 = math.exp %508 : vector<8x64xf32>
    %cst_84 = arith.constant 1.000000e+00 : f32
    %510 = vector.broadcast %cst_84 : f32 to vector<8x64xf32>
    %511 = arith.addf %510, %509 : vector<8x64xf32>
    %512 = arith.divf %510, %511 : vector<8x64xf32>
    %513 = vector.extract_strided_slice %512 {offsets = [0, 0], sizes = [8, 32], strides = [1, 1]} : vector<8x64xf32> to vector<8x32xf32>
    %514 = vector.extract_strided_slice %512 {offsets = [0, 32], sizes = [8, 32], strides = [1, 1]} : vector<8x64xf32> to vector<8x32xf32>
    %515 = vector.extract_strided_slice %506 {offsets = [0, 64], sizes = [8, 32], strides = [1, 1]} : vector<8x128xf32> to vector<8x32xf32>
    %516 = vector.extract_strided_slice %506 {offsets = [0, 96], sizes = [8, 32], strides = [1, 1]} : vector<8x128xf32> to vector<8x32xf32>
    %517 = arith.mulf %513, %516 : vector<8x32xf32>
    %518 = arith.addf %515, %517 : vector<8x32xf32>
    %519 = math.tanh %518 : vector<8x32xf32>
    %cst_85 = arith.constant 1.000000e+00 : f32
    %520 = vector.broadcast %cst_85 : f32 to vector<8x32xf32>
    %521 = arith.subf %520, %514 : vector<8x32xf32>
    %522 = arith.mulf %521, %519 : vector<8x32xf32>
    %523 = arith.mulf %514, %501 : vector<8x32xf32>
    %524 = arith.addf %522, %523 : vector<8x32xf32>
    %525 = tpu.concatenate %144, %207, %270, %333, %396, %459, %501, %524 in 0 : vector<8x32xf32>, vector<8x32xf32>, vector<8x32xf32>, vector<8x32xf32>, vector<8x32xf32>, vector<8x32xf32>, vector<8x32xf32>, vector<8x32xf32> -> vector<64x32xf32>
    %c0_86 = arith.constant 0 : index
    %c0_87 = arith.constant 0 : index
    %526 = vector.load %arg4[%c0_86, %c0_87] : memref<32x128xf32, #tpu.memory_space<vmem>>, vector<32x128xf32>
    %cst_88 = arith.constant dense<0.000000e+00> : vector<64x128xf32>
    %527 = tpu.matmul %525, %526, %cst_88 {dimension_numbers = #tpu.dot_dimension_numbers<[1], [0], [0], [1], [0, 0, 1, 1], [], []>} : vector<64x32xf32>, vector<32x128xf32>, vector<64x128xf32> -> vector<64x128xf32>
    %c0_89 = arith.constant 0 : index
    %c0_90 = arith.constant 0 : index
    %528 = vector.load %arg5[%c0_89, %c0_90] : memref<1x128xf32, #tpu.memory_space<vmem>>, vector<1x128xf32>
    %529 = vector.broadcast %528 : vector<1x128xf32> to vector<64x128xf32>
    %530 = arith.addf %527, %529 : vector<64x128xf32>
    %c0_91 = arith.constant 0 : index
    %c0_92 = arith.constant 0 : index
    %531 = vector.load %arg6[%c0_91, %c0_92] : memref<64x128xf32, #tpu.memory_space<vmem>>, vector<64x128xf32>
    tpu.vector_store %arg6[%c0_91, %c0_92], %530 {strides = array<i32>} : memref<64x128xf32, #tpu.memory_space<vmem>>, vector<64x128xf32>,
    return
  }
}

</mosaic_0001>

<llo_original>
// kernel: hypernym_hyponym_gru_forward.1
$region0: #{hypernym_hyponym_gru_forward.1}
  #allocation0 [shape = 'u32[]', space=smem, size = 0x4, offset = 0x4, fixed_abs, tag = 'smem constant byte address 0x4 - core index']
  #allocation1 [shape = 'u32[144,128]{1,0:T(1,128)}', space=vmem, size = 0x12000, scoped, tag = 'internal scratch']
  %s0 = inlined_call_operand.vmem [shape: s32[64,1], index: 0, kind: input, shape index: {}]
  %s1 = inlined_call_operand.vmem [shape: f32[50,128], index: 1, kind: input, shape index: {}]
  %s2 = inlined_call_operand.vmem [shape: f32[96,384], index: 2, kind: input, shape index: {}]
  %s3 = inlined_call_operand.vmem [shape: f32[1,384], index: 3, kind: input, shape index: {}]
  %s4 = inlined_call_operand.vmem [shape: f32[32,128], index: 4, kind: input, shape index: {}]
  %s5 = inlined_call_operand.vmem [shape: f32[1,128], index: 5, kind: input, shape index: {}]
  %s6 = inlined_call_operand.vmem [shape: f32[64,128], index: 6, kind: output, shape index: {}]
  %s7 = sld [smem:[#allocation0]]
  $region34: #{hypernym_hyponym_gru_forward.1} parent=0
    _
  %s9 = ssub.s32 1, %s7
  %s10 = scalar_select 0, %s9, %s7
  // Predicated region
  $region2: #{hypernym_hyponym_gru_forward.1} parent=0 // pred_check
    _
  $region3: #{hypernym_hyponym_gru_forward.1} parent=0 // pred_check_branch
    %12 = sbr.rel (0) target = $region5
  $region4: #{hypernym_hyponym_gru_forward.1} parent=0 // pred_region
    _
  $region5: #{hypernym_hyponym_gru_forward.1} parent=0 // pred_fallthru
    _
  // Predicated region
  $region6: #{hypernym_hyponym_gru_forward.1} parent=0 // pred_check
    _
  $region7: #{hypernym_hyponym_gru_forward.1} parent=0 // pred_check_branch
    %14 = sbr.rel (0) target = $region9
  $region8: #{hypernym_hyponym_gru_forward.1} parent=0 // pred_region
    _
  $region9: #{hypernym_hyponym_gru_forward.1} parent=0 // pred_fallthru
    _
  // Predicated region
  $region10: #{hypernym_hyponym_gru_forward.1} parent=0 // pred_check
    _
  $region11: #{hypernym_hyponym_gru_forward.1} parent=0 // pred_check_branch
    %16 = sbr.rel (0) target = $region13
  $region12: #{hypernym_hyponym_gru_forward.1} parent=0 // pred_region
    _
  $region13: #{hypernym_hyponym_gru_forward.1} parent=0 // pred_fallthru
    _
  // Predicated region
  $region14: #{hypernym_hyponym_gru_forward.1} parent=0 // pred_check
    _
  $region15: #{hypernym_hyponym_gru_forward.1} parent=0 // pred_check_branch
    %18 = sbr.rel (0) target = $region17
  $region16: #{hypernym_hyponym_gru_forward.1} parent=0 // pred_region
    _
  $region17: #{hypernym_hyponym_gru_forward.1} parent=0 // pred_fallthru
    _
  // Predicated region
  $region18: #{hypernym_hyponym_gru_forward.1} parent=0 // pred_check
    _
  $region19: #{hypernym_hyponym_gru_forward.1} parent=0 // pred_check_branch
    %20 = sbr.rel (0) target = $region21
  $region20: #{hypernym_hyponym_gru_forward.1} parent=0 // pred_region
    _
  $region21: #{hypernym_hyponym_gru_forward.1} parent=0 // pred_fallthru
    _
  // Predicated region
  $region22: #{hypernym_hyponym_gru_forward.1} parent=0 // pred_check
    _
  $region23: #{hypernym_hyponym_gru_forward.1} parent=0 // pred_check_branch
    %22 = sbr.rel (0) target = $region25
  $region24: #{hypernym_hyponym_gru_forward.1} parent=0 // pred_region
    _
  $region25: #{hypernym_hyponym_gru_forward.1} parent=0 // pred_fallthru
    _
  %v23 = vld [vmem:[%s0] sm:$0xff]
  %v24 = vld [vmem:[%s0 + $0x8] sm:$0xff]
  %v25 = vld [vmem:[%s0 + $0x10] sm:$0xff]
  %v26 = vld [vmem:[%s0 + $0x18] sm:$0xff]
  %v27 = vld [vmem:[%s0 + $0x20] sm:$0xff]
  %v28 = vld [vmem:[%s0 + $0x28] sm:$0xff]
  %v29 = vld [vmem:[%s0 + $0x30] sm:$0xff]
  %v30 = vld [vmem:[%s0 + $0x38] sm:$0xff]
  %v31 = vlaneseq
  %v32 = vand.u32 %v31, 127
  %33 = vset.pattern.permute.xlu0 0
  %34 = vperm.xlu0 %33, %v23
  %v35 = vpop.permute.xlu0 %34
  %36 = vset.pattern.permute.xlu0 0
  %37 = vperm.xlu0 %36, %v24
  %v38 = vpop.permute.xlu0 %37
  %39 = vset.pattern.permute.xlu0 0
  %40 = vperm.xlu0 %39, %v25
  %v41 = vpop.permute.xlu0 %40
  %42 = vset.pattern.permute.xlu0 0
  %43 = vperm.xlu0 %42, %v26
  %v44 = vpop.permute.xlu0 %43
  %45 = vset.pattern.permute.xlu0 0
  %46 = vperm.xlu0 %45, %v27
  %v47 = vpop.permute.xlu0 %46
  %48 = vset.pattern.permute.xlu0 0
  %49 = vperm.xlu0 %48, %v28
  %v50 = vpop.permute.xlu0 %49
  %51 = vset.pattern.permute.xlu0 0
  %52 = vperm.xlu0 %51, %v29
  %v53 = vpop.permute.xlu0 %52
  %54 = vset.pattern.permute.xlu0 0
  %55 = vperm.xlu0 %54, %v30
  %v56 = vpop.permute.xlu0 %55
  %vm57 = vcmp.eq.s32.totalorder %v35, %v32
  %vm58 = vcmp.eq.s32.totalorder %v38, %v32
  %vm59 = vcmp.eq.s32.totalorder %v41, %v32
  %vm60 = vcmp.eq.s32.totalorder %v44, %v32
  %vm61 = vcmp.eq.s32.totalorder %v47, %v32
  %vm62 = vcmp.eq.s32.totalorder %v50, %v32
  %vm63 = vcmp.eq.s32.totalorder %v53, %v32
  %vm64 = vcmp.eq.s32.totalorder %v56, %v32
  %v65 = vsel %vm57, 1.0, 0.0
  %v66 = vsel %vm58, 1.0, 0.0
  %v67 = vsel %vm59, 1.0, 0.0
  %v68 = vsel %vm60, 1.0, 0.0
  %v69 = vsel %vm61, 1.0, 0.0
  %v70 = vsel %vm62, 1.0, 0.0
  %v71 = vsel %vm63, 1.0, 0.0
  %v72 = vsel %vm64, 1.0, 0.0
  %v73 = vld [vmem:[%s1] sm:$0xff]
  %v74 = vld [vmem:[%s1 + $0x8] sm:$0xff]
  %v75 = vld [vmem:[%s1 + $0x10] sm:$0xff]
  %v76 = vld [vmem:[%s1 + $0x18] sm:$0xff]
  %v77 = vld [vmem:[%s1 + $0x20] sm:$0xff]
  %v78 = vld [vmem:[%s1 + $0x28] sm:$0xff]
  %v79 = vld [vmem:[%s1 + $0x30] sm:$0x3]
  %vm80 = vcmask 408576
  %v82 = vsel %vm80, %v65, 0
  %v85 = vsel %vm80, %v66, 0
  %v88 = vsel %vm80, %v67, 0
  %v91 = vsel %vm80, %v68, 0
  %v94 = vsel %vm80, %v69, 0
  %v97 = vsel %vm80, %v70, 0
  %v100 = vsel %vm80, %v71, 0
  %v103 = vsel %vm80, %v72, 0
  %vm105 = vcmask 1041408
  %v107 = vsel %vm105, %v79, 0
  %109 = vmatprep.subr.mxu0 0.0
  %110 = vmatpush1.msra.mxu0 0.0
  %111 = vmatprep.subr.mxu0 0.0
  %112 = vmatpush1.msra.mxu0 0.0
  %113 = vmatprep.subr.mxu0 0.0
  %114 = vmatpush1.msra.mxu0 0.0
  %115 = vmatprep.subr.mxu0 0.0
  %116 = vmatpush1.msra.mxu0 0.0
  %117 = vmatprep.subr.mxu0 0.0
  %118 = vmatpush1.msra.mxu0 0.0
  %119 = vmatprep.subr.mxu0 0.0
  %120 = vmatpush1.msra.mxu0 0.0
  %121 = vmatprep.subr.mxu0 0.0
  %122 = vmatpush1.msra.mxu0 0.0
  %123 = vmatprep.subr.mxu0 0.0
  %124 = vmatpush1.msra.mxu0 0.0
  %125 = vmatprep.subr.mxu0 0.0
  %126 = vmatpush1.msra.mxu0 0.0
  %127 = vmatprep.subr.mxu0 0.0
  %128 = vmatpush1.msra.mxu0 %v107
  %129 = vmatprep.subr.mxu0 0.0
  %130 = vmatpush1.msra.mxu0 %v78
  %131 = vmatprep.subr.mxu0 0.0
  %132 = vmatpush1.msra.mxu0 %v77
  %133 = vmatprep.subr.mxu0 0.0
  %134 = vmatpush1.msra.mxu0 %v76
  %135 = vmatprep.subr.mxu0 0.0
  %136 = vmatpush1.msra.mxu0 %v75
  %137 = vmatprep.subr.mxu0 0.0
  %138 = vmatpush1.msra.mxu0 %v74
  %139 = vmatprep.subr.mxu0 0.0
  %140 = vmatpush1.msra.mxu0 %v73
  %141 = vmatprep.subr.mxu0 0.0
  %142 = vmatpush2.msra.mxu0 0.0
  %143 = vmatprep.subr.mxu0 0.0
  %144 = vmatpush2.msra.mxu0 0.0
  %145 = vmatprep.subr.mxu0 0.0
  %146 = vmatpush2.msra.mxu0 0.0
  %147 = vmatprep.subr.mxu0 0.0
  %148 = vmatpush2.msra.mxu0 0.0
  %149 = vmatprep.subr.mxu0 0.0
  %150 = vmatpush2.msra.mxu0 0.0
  %151 = vmatprep.subr.mxu0 0.0
  %152 = vmatpush2.msra.mxu0 0.0
  %153 = vmatprep.subr.mxu0 0.0
  %154 = vmatpush2.msra.mxu0 0.0
  %155 = vmatprep.subr.mxu0 0.0
  %156 = vmatpush2.msra.mxu0 0.0
  %157 = vmatprep.subr.mxu0 0.0
  %158 = vmatpush2.msra.mxu0 0.0
  %159 = vmatprep.subr.mxu0 0.0
  %160 = vmatpush2.msra.mxu0 0.0
  %161 = vmatprep.subr.mxu0 0.0
  %162 = vmatpush2.msra.mxu0 0.0
  %163 = vmatprep.subr.mxu0 0.0
  %164 = vmatpush2.msra.mxu0 0.0
  %165 = vmatprep.subr.mxu0 0.0
  %166 = vmatpush2.msra.mxu0 0.0
  %167 = vmatprep.subr.mxu0 0.0
  %168 = vmatpush2.msra.mxu0 0.0
  %169 = vmatprep.subr.mxu0 0.0
  %170 = vmatpush2.msra.mxu0 0.0
  %171 = vmatprep.subr.mxu0 0.0
  %172 = vmatpush2.msra.mxu0 0.0
  %173 = vmatprep.mubr.f32.mxu0 0.0
  %174 = vmatmul.mubr.f32.gmra.mxu0 %v82
  %v175 = vpop.f32.mrf.mxu0
  %v176 = vadd.f32 0.0, %v175
  %v177 = vpop.f32.mrf.mxu0
  %178 = vmatprep.mubr.f32.mxu0 0.0
  %179 = vmatmul.mubr.f32.gmra.mxu0 %v85
  %v180 = vpop.f32.mrf.mxu0
  %v181 = vadd.f32 0.0, %v180
  %v182 = vpop.f32.mrf.mxu0
  %183 = vmatprep.mubr.f32.mxu0 0.0
  %184 = vmatmul.mubr.f32.gmra.mxu0 %v88
  %v185 = vpop.f32.mrf.mxu0
  %v186 = vadd.f32 0.0, %v185
  %v187 = vpop.f32.mrf.mxu0
  %188 = vmatprep.mubr.f32.mxu0 0.0
  %189 = vmatmul.mubr.f32.gmra.mxu0 %v91
  %v190 = vpop.f32.mrf.mxu0
  %v191 = vadd.f32 0.0, %v190
  %v192 = vpop.f32.mrf.mxu0
  %193 = vmatprep.mubr.f32.mxu0 0.0
  %194 = vmatmul.mubr.f32.gmra.mxu0 %v94
  %v195 = vpop.f32.mrf.mxu0
  %v196 = vadd.f32 0.0, %v195
  %v197 = vpop.f32.mrf.mxu0
  %198 = vmatprep.mubr.f32.mxu0 0.0
  %199 = vmatmul.mubr.f32.gmra.mxu0 %v97
  %v200 = vpop.f32.mrf.mxu0
  %v201 = vadd.f32 0.0, %v200
  %v202 = vpop.f32.mrf.mxu0
  %203 = vmatprep.mubr.f32.mxu0 0.0
  %204 = vmatmul.mubr.f32.gmra.mxu0 %v100
  %v205 = vpop.f32.mrf.mxu0
  %v206 = vadd.f32 0.0, %v205
  %v207 = vpop.f32.mrf.mxu0
  %208 = vmatprep.mubr.f32.mxu0 0.0
  %209 = vmatmul.mubr.f32.gmra.mxu0 %v103
  %v210 = vpop.f32.mrf.mxu0
  %v211 = vadd.f32 0.0, %v210
  %v212 = vpop.f32.mrf.mxu0
  %213 = vdwg.mxu0
  %v214 = vld [vmem:[%s3] sm:$0x7]
  %v216 = vlaneseq
  %v217 = vshrl.u32 %v216, 7
  %v218 = vsub.s32 0, %v217
  %v219 = vrot.slane %v214, %v218
  %v220 = vlaneseq
  %v221 = vshrl.u32 %v220, 7
  %v222 = vsub.s32 1, %v221
  %v223 = vrot.slane %v214, %v222
  %v224 = vlaneseq
  %v225 = vshrl.u32 %v224, 7
  %v226 = vsub.s32 2, %v225
  %v227 = vrot.slane %v214, %v226
  %v231 = vld [vmem:[%s2] sm:$0xff]
  %v232 = vld [vmem:[%s2 + $0x8] sm:$0xff]
  %v233 = vld [vmem:[%s2 + $0x10] sm:$0xff]
  %v234 = vld [vmem:[%s2 + $0x18] sm:$0xff]
  %v235 = vld [vmem:[%s2 + $0x20] sm:$0xff]
  %v236 = vld [vmem:[%s2 + $0x28] sm:$0xff]
  %v237 = vld [vmem:[%s2 + $0x30] sm:$0xff]
  %v238 = vld [vmem:[%s2 + $0x38] sm:$0xff]
  %v239 = vld [vmem:[%s2 + $0x40] sm:$0xff]
  %v240 = vld [vmem:[%s2 + $0x48] sm:$0xff]
  %v241 = vld [vmem:[%s2 + $0x50] sm:$0xff]
  %v242 = vld [vmem:[%s2 + $0x58] sm:$0xff]
  %v243 = vld [vmem:[%s2 + $0x60] sm:$0xff]
  %v244 = vld [vmem:[%s2 + $0x68] sm:$0xff]
  %v245 = vld [vmem:[%s2 + $0x70] sm:$0xff]
  %v246 = vld [vmem:[%s2 + $0x78] sm:$0xff]
  %v247 = vld [vmem:[%s2 + $0x80] sm:$0xff]
  %v248 = vld [vmem:[%s2 + $0x88] sm:$0xff]
  %v249 = vld [vmem:[%s2 + $0x90] sm:$0xff]
  %v250 = vld [vmem:[%s2 + $0x98] sm:$0xff]
  %v251 = vld [vmem:[%s2 + $0xa0] sm:$0xff]
  %v252 = vld [vmem:[%s2 + $0xa8] sm:$0xff]
  %v253 = vld [vmem:[%s2 + $0xb0] sm:$0xff]
  %v254 = vld [vmem:[%s2 + $0xb8] sm:$0xff]
  %v255 = vld [vmem:[%s2 + $0xc0] sm:$0xff]
  %v256 = vld [vmem:[%s2 + $0xc8] sm:$0xff]
  %v257 = vld [vmem:[%s2 + $0xd0] sm:$0xff]
  %v258 = vld [vmem:[%s2 + $0xd8] sm:$0xff]
  %v259 = vld [vmem:[%s2 + $0xe0] sm:$0xff]
  %v260 = vld [vmem:[%s2 + $0xe8] sm:$0xff]
  %v261 = vld [vmem:[%s2 + $0xf0] sm:$0xff]
  %v262 = vld [vmem:[%s2 + $0xf8] sm:$0xff]
  %v263 = vld [vmem:[%s2 + $0x100] sm:$0xff]
  %v264 = vld [vmem:[%s2 + $0x108] sm:$0xff]
  %v265 = vld [vmem:[%s2 + $0x110] sm:$0xff]
  %v266 = vld [vmem:[%s2 + $0x118] sm:$0xff]
  %vm267 = vcmask 785408
  %v269 = vsel %vm267, 0.0, 0
  %271 = vmatprep.subr.mxu0 0.0
  %272 = vmatpush1.msra.mxu0 0.0
  %273 = vmatprep.subr.mxu0 0.0
  %274 = vmatpush1.msra.mxu0 0.0
  %275 = vmatprep.subr.mxu0 0.0
  %276 = vmatpush1.msra.mxu0 0.0
  %277 = vmatprep.subr.mxu0 0.0
  %278 = vmatpush1.msra.mxu0 0.0
  %279 = vmatprep.subr.mxu0 %v265
  %280 = vmatpush1.msra.mxu0 %v264
  %281 = vmatprep.subr.mxu0 %v262
  %282 = vmatpush1.msra.mxu0 %v261
  %283 = vmatprep.subr.mxu0 %v259
  %284 = vmatpush1.msra.mxu0 %v258
  %285 = vmatprep.subr.mxu0 %v256
  %286 = vmatpush1.msra.mxu0 %v255
  %287 = vmatprep.subr.mxu0 %v253
  %288 = vmatpush1.msra.mxu0 %v252
  %289 = vmatprep.subr.mxu0 %v250
  %290 = vmatpush1.msra.mxu0 %v249
  %291 = vmatprep.subr.mxu0 %v247
  %292 = vmatpush1.msra.mxu0 %v246
  %293 = vmatprep.subr.mxu0 %v244
  %294 = vmatpush1.msra.mxu0 %v243
  %295 = vmatprep.subr.mxu0 %v241
  %296 = vmatpush1.msra.mxu0 %v240
  %297 = vmatprep.subr.mxu0 %v238
  %298 = vmatpush1.msra.mxu0 %v237
  %299 = vmatprep.subr.mxu0 %v235
  %300 = vmatpush1.msra.mxu0 %v234
  %301 = vmatprep.subr.mxu0 %v232
  %302 = vmatpush1.msra.mxu0 %v231
  %303 = vmatprep.subr.mxu0 0.0
  %304 = vmatpush2.msra.mxu0 0.0
  %305 = vmatprep.subr.mxu0 0.0
  %306 = vmatpush2.msra.mxu0 0.0
  %307 = vmatprep.subr.mxu0 0.0
  %308 = vmatpush2.msra.mxu0 0.0
  %309 = vmatprep.subr.mxu0 0.0
  %310 = vmatpush2.msra.mxu0 0.0
  %311 = vmatprep.subr.mxu0 0.0
  %312 = vmatpush2.msra.mxu0 0.0
  %313 = vmatprep.subr.mxu0 0.0
  %314 = vmatpush2.msra.mxu0 0.0
  %315 = vmatprep.subr.mxu0 0.0
  %316 = vmatpush2.msra.mxu0 0.0
  %317 = vmatprep.subr.mxu0 0.0
  %318 = vmatpush2.msra.mxu0 0.0
  %319 = vmatprep.subr.mxu0 0.0
  %320 = vmatpush2.msra.mxu0 0.0
  %321 = vmatprep.subr.mxu0 0.0
  %322 = vmatpush2.msra.mxu0 0.0
  %323 = vmatprep.subr.mxu0 0.0
  %324 = vmatpush2.msra.mxu0 0.0
  %325 = vmatprep.subr.mxu0 0.0
  %326 = vmatpush2.msra.mxu0 0.0
  %327 = vmatprep.subr.mxu0 0.0
  %328 = vmatpush2.msra.mxu0 0.0
  %329 = vmatprep.subr.mxu0 0.0
  %330 = vmatpush2.msra.mxu0 0.0
  %331 = vmatprep.subr.mxu0 0.0
  %332 = vmatpush2.msra.mxu0 0.0
  %333 = vmatprep.subr.mxu0 0.0
  %334 = vmatpush2.msra.mxu0 0.0
  %335 = vmatprep.mubr.f32.mxu0 0.0
  %336 = vmatmul.mubr.f32.gmra.mxu0 %v269
  %v337 = vpop.f32.mrf.mxu0
  %v338 = vadd.f32 %v219, %v337
  %v339 = vpop.f32.mrf.mxu0
  %340 = vdwg.mxu0
  %v341 = vadd.f32 %v338, %v176
  %v342 = vxor.u32 %v341, 2147483648
  %v343 = vmul.f32 %v342, 1.442695
  %v344 = vpow.pop %v343
  %v345 = vadd.f32 %v344, 1.0
  %v346 = vrcp.pop %v345
  %v347 = vmul.f32 1.0, %v346
  %349 = vrot.lane.b32.xlu0 %v341, 32
  %v350 = vpop.permute.xlu0 %349
  %v352 = vmul.f32 %v347, %v350
  %354 = vrot.lane.b32.xlu0 %v352, 64
  %v355 = vpop.permute.xlu0 %354
  %v357 = vadd.f32 %v341, %v355
  %v358 = vtanh.pop %v357
  %v359 = vsub.f32 1.0, %v347
  %361 = vrot.lane.b32.xlu0 %v358, 96
  %v362 = vpop.permute.xlu0 %361
  %v364 = vmul.f32 %v359, %v362
  %v365 = vmul.f32 %v347, 0.0
  %v366 = vadd.f32 %v364, %v365
  %368 = vrot.lane.b32.xlu0 %v366, 96
  %v369 = vpop.permute.xlu0 %368
  %vm371 = vcmask 261120
  %v372 = vsel %vm371, %v369, 0.0
  %vm373 = vcmask 523264
  %v374 = vsel %vm373, %v372, 0.0
  %v376 = vsel %vm267, %v374, 0
  %378 = vmatprep.subr.mxu0 0.0
  %379 = vmatpush1.msra.mxu0 0.0
  %380 = vmatprep.subr.mxu0 0.0
  %381 = vmatpush1.msra.mxu0 0.0
  %382 = vmatprep.subr.mxu0 0.0
  %383 = vmatpush1.msra.mxu0 0.0
  %384 = vmatprep.subr.mxu0 0.0
  %385 = vmatpush1.msra.mxu0 0.0
  %386 = vmatprep.subr.mxu0 %v265
  %387 = vmatpush1.msra.mxu0 %v264
  %388 = vmatprep.subr.mxu0 %v262
  %389 = vmatpush1.msra.mxu0 %v261
  %390 = vmatprep.subr.mxu0 %v259
  %391 = vmatpush1.msra.mxu0 %v258
  %392 = vmatprep.subr.mxu0 %v256
  %393 = vmatpush1.msra.mxu0 %v255
  %394 = vmatprep.subr.mxu0 %v253
  %395 = vmatpush1.msra.mxu0 %v252
  %396 = vmatprep.subr.mxu0 %v250
  %397 = vmatpush1.msra.mxu0 %v249
  %398 = vmatprep.subr.mxu0 %v247
  %399 = vmatpush1.msra.mxu0 %v246
  %400 = vmatprep.subr.mxu0 %v244
  %401 = vmatpush1.msra.mxu0 %v243
  %402 = vmatprep.subr.mxu0 %v241
  %403 = vmatpush1.msra.mxu0 %v240
  %404 = vmatprep.subr.mxu0 %v238
  %405 = vmatpush1.msra.mxu0 %v237
  %406 = vmatprep.subr.mxu0 %v235
  %407 = vmatpush1.msra.mxu0 %v234
  %408 = vmatprep.subr.mxu0 %v232
  %409 = vmatpush1.msra.mxu0 %v231
  %410 = vmatprep.subr.mxu0 0.0
  %411 = vmatpush2.msra.mxu0 0.0
  %412 = vmatprep.subr.mxu0 0.0
  %413 = vmatpush2.msra.mxu0 0.0
  %414 = vmatprep.subr.mxu0 0.0
  %415 = vmatpush2.msra.mxu0 0.0
  %416 = vmatprep.subr.mxu0 0.0
  %417 = vmatpush2.msra.mxu0 0.0
  %418 = vmatprep.subr.mxu0 0.0
  %419 = vmatpush2.msra.mxu0 0.0
  %420 = vmatprep.subr.mxu0 0.0
  %421 = vmatpush2.msra.mxu0 0.0
  %422 = vmatprep.subr.mxu0 0.0
  %423 = vmatpush2.msra.mxu0 0.0
  %424 = vmatprep.subr.mxu0 0.0
  %425 = vmatpush2.msra.mxu0 0.0
  %426 = vmatprep.subr.mxu0 0.0
  %427 = vmatpush2.msra.mxu0 0.0
  %428 = vmatprep.subr.mxu0 0.0
  %429 = vmatpush2.msra.mxu0 0.0
  %430 = vmatprep.subr.mxu0 0.0
  %431 = vmatpush2.msra.mxu0 0.0
  %432 = vmatprep.subr.mxu0 0.0
  %433 = vmatpush2.msra.mxu0 0.0
  %434 = vmatprep.subr.mxu0 0.0
  %435 = vmatpush2.msra.mxu0 0.0
  %436 = vmatprep.subr.mxu0 0.0
  %437 = vmatpush2.msra.mxu0 0.0
  %438 = vmatprep.subr.mxu0 0.0
  %439 = vmatpush2.msra.mxu0 0.0
  %440 = vmatprep.subr.mxu0 0.0
  %441 = vmatpush2.msra.mxu0 0.0
  %442 = vmatprep.mubr.f32.mxu0 0.0
  %443 = vmatmul.mubr.f32.gmra.mxu0 %v376
  %v444 = vpop.f32.mrf.mxu0
  %v445 = vadd.f32 %v219, %v444
  %v446 = vpop.f32.mrf.mxu0
  %v447 = vadd.f32 %v223, %v446
  %448 = vdwg.mxu0
  %v449 = vadd.f32 %v445, %v181
  %v450 = vxor.u32 %v449, 2147483648
  %v451 = vmul.f32 %v450, 1.442695
  %v452 = vpow.pop %v451
  %v453 = vadd.f32 %v452, 1.0
  %v454 = vrcp.pop %v453
  %v455 = vmul.f32 1.0, %v454
  %457 = vrot.lane.b32.xlu0 %v449, 32
  %v458 = vpop.permute.xlu0 %457
  %v460 = vmul.f32 %v455, %v458
  %462 = vrot.lane.b32.xlu0 %v460, 64
  %v463 = vpop.permute.xlu0 %462
  %v465 = vadd.f32 %v449, %v463
  %v466 = vtanh.pop %v465
  %v467 = vsub.f32 1.0, %v455
  %469 = vrot.lane.b32.xlu0 %v466, 96
  %v470 = vpop.permute.xlu0 %469
  %v472 = vmul.f32 %v467, %v470
  %v473 = vmul.f32 %v455, %v366
  %v474 = vadd.f32 %v472, %v473
  %v475 = vxor.u32 %v447, 2147483648
  %v476 = vmul.f32 %v475, 1.442695
  %v477 = vpow.pop %v476
  %v478 = vadd.f32 %v477, 1.0
  %v479 = vrcp.pop %v478
  %v480 = vmul.f32 1.0, %v479
  %482 = vrot.lane.b32.xlu0 %v447, 32
  %v483 = vpop.permute.xlu0 %482
  %v485 = vmul.f32 %v480, %v483
  %487 = vrot.lane.b32.xlu0 %v485, 64
  %v488 = vpop.permute.xlu0 %487
  %v490 = vadd.f32 %v447, %v488
  %v491 = vtanh.pop %v490
  %v492 = vsub.f32 1.0, %v480
  %494 = vrot.lane.b32.xlu0 %v491, 96
  %v495 = vpop.permute.xlu0 %494
  %v497 = vmul.f32 %v492, %v495
  %v498 = vmul.f32 %v480, 0.0
  %v499 = vadd.f32 %v497, %v498
  %501 = vrot.lane.b32.xlu0 %v474, 96
  %v502 = vpop.permute.xlu0 %501
  %v504 = vsel %vm371, %v502, %v499
  %v505 = vsel %vm373, %v504, 0.0
  %v507 = vsel %vm267, %v505, 0
  %509 = vmatprep.subr.mxu0 0.0
  %510 = vmatpush1.msra.mxu0 0.0
  %511 = vmatprep.subr.mxu0 0.0
  %512 = vmatpush1.msra.mxu0 0.0
  %513 = vmatprep.subr.mxu0 0.0
  %514 = vmatpush1.msra.mxu0 0.0
  %515 = vmatprep.subr.mxu0 0.0
  %516 = vmatpush1.msra.mxu0 0.0
  %517 = vmatprep.subr.mxu0 %v265
  %518 = vmatpush1.msra.mxu0 %v264
  %519 = vmatprep.subr.mxu0 %v262
  %520 = vmatpush1.msra.mxu0 %v261
  %521 = vmatprep.subr.mxu0 %v259
  %522 = vmatpush1.msra.mxu0 %v258
  %523 = vmatprep.subr.mxu0 %v256
  %524 = vmatpush1.msra.mxu0 %v255
  %525 = vmatprep.subr.mxu0 %v253
  %526 = vmatpush1.msra.mxu0 %v252
  %527 = vmatprep.subr.mxu0 %v250
  %528 = vmatpush1.msra.mxu0 %v249
  %529 = vmatprep.subr.mxu0 %v247
  %530 = vmatpush1.msra.mxu0 %v246
  %531 = vmatprep.subr.mxu0 %v244
  %532 = vmatpush1.msra.mxu0 %v243
  %533 = vmatprep.subr.mxu0 %v241
  %534 = vmatpush1.msra.mxu0 %v240
  %535 = vmatprep.subr.mxu0 %v238
  %536 = vmatpush1.msra.mxu0 %v237
  %537 = vmatprep.subr.mxu0 %v235
  %538 = vmatpush1.msra.mxu0 %v234
  %539 = vmatprep.subr.mxu0 %v232
  %540 = vmatpush1.msra.mxu0 %v231
  %541 = vmatprep.subr.mxu0 0.0
  %542 = vmatpush2.msra.mxu0 0.0
  %543 = vmatprep.subr.mxu0 0.0
  %544 = vmatpush2.msra.mxu0 0.0
  %545 = vmatprep.subr.mxu0 0.0
  %546 = vmatpush2.msra.mxu0 0.0
  %547 = vmatprep.subr.mxu0 0.0
  %548 = vmatpush2.msra.mxu0 0.0
  %549 = vmatprep.subr.mxu0 0.0
  %550 = vmatpush2.msra.mxu0 0.0
  %551 = vmatprep.subr.mxu0 0.0
  %552 = vmatpush2.msra.mxu0 0.0
  %553 = vmatprep.subr.mxu0 0.0
  %554 = vmatpush2.msra.mxu0 0.0
  %555 = vmatprep.subr.mxu0 0.0
  %556 = vmatpush2.msra.mxu0 0.0
  %557 = vmatprep.subr.mxu0 0.0
  %558 = vmatpush2.msra.mxu0 0.0
  %559 = vmatprep.subr.mxu0 0.0
  %560 = vmatpush2.msra.mxu0 0.0
  %561 = vmatprep.subr.mxu0 0.0
  %562 = vmatpush2.msra.mxu0 0.0
  %563 = vmatprep.subr.mxu0 0.0
  %564 = vmatpush2.msra.mxu0 0.0
  %565 = vmatprep.subr.mxu0 0.0
  %566 = vmatpush2.msra.mxu0 0.0
  %567 = vmatprep.subr.mxu0 0.0
  %568 = vmatpush2.msra.mxu0 0.0
  %569 = vmatprep.subr.mxu0 0.0
  %570 = vmatpush2.msra.mxu0 0.0
  %571 = vmatprep.subr.mxu0 0.0
  %572 = vmatpush2.msra.mxu0 0.0
  %573 = vmatprep.mubr.f32.mxu0 0.0
  %574 = vmatmul.mubr.f32.gmra.mxu0 %v507
  %v575 = vpop.f32.mrf.mxu0
  %v576 = vadd.f32 %v219, %v575
  %v577 = vpop.f32.mrf.mxu0
  %v578 = vadd.f32 %v223, %v577
  %579 = vdwg.mxu0
  %580 = vmatprep.subr.mxu0 0.0
  %581 = vmatpush1.msra.mxu0 0.0
  %582 = vmatprep.subr.mxu0 0.0
  %583 = vmatpush1.msra.mxu0 0.0
  %584 = vmatprep.subr.mxu0 0.0
  %585 = vmatpush1.msra.mxu0 0.0
  %586 = vmatprep.subr.mxu0 0.0
  %587 = vmatpush1.msra.mxu0 0.0
  %588 = vmatprep.subr.mxu0 0.0
  %589 = vmatpush1.msra.mxu0 %v266
  %590 = vmatprep.subr.mxu0 0.0
  %591 = vmatpush1.msra.mxu0 %v263
  %592 = vmatprep.subr.mxu0 0.0
  %593 = vmatpush1.msra.mxu0 %v260
  %594 = vmatprep.subr.mxu0 0.0
  %595 = vmatpush1.msra.mxu0 %v257
  %596 = vmatprep.subr.mxu0 0.0
  %597 = vmatpush1.msra.mxu0 %v254
  %598 = vmatprep.subr.mxu0 0.0
  %599 = vmatpush1.msra.mxu0 %v251
  %600 = vmatprep.subr.mxu0 0.0
  %601 = vmatpush1.msra.mxu0 %v248
  %602 = vmatprep.subr.mxu0 0.0
  %603 = vmatpush1.msra.mxu0 %v245
  %604 = vmatprep.subr.mxu0 0.0
  %605 = vmatpush1.msra.mxu0 %v242
  %606 = vmatprep.subr.mxu0 0.0
  %607 = vmatpush1.msra.mxu0 %v239
  %608 = vmatprep.subr.mxu0 0.0
  %609 = vmatpush1.msra.mxu0 %v236
  %610 = vmatprep.subr.mxu0 0.0
  %611 = vmatpush1.msra.mxu0 %v233
  %612 = vmatprep.subr.mxu0 0.0
  %613 = vmatpush2.msra.mxu0 0.0
  %614 = vmatprep.subr.mxu0 0.0
  %615 = vmatpush2.msra.mxu0 0.0
  %616 = vmatprep.subr.mxu0 0.0
  %617 = vmatpush2.msra.mxu0 0.0
  %618 = vmatprep.subr.mxu0 0.0
  %619 = vmatpush2.msra.mxu0 0.0
  %620 = vmatprep.subr.mxu0 0.0
  %621 = vmatpush2.msra.mxu0 0.0
  %622 = vmatprep.subr.mxu0 0.0
  %623 = vmatpush2.msra.mxu0 0.0
  %624 = vmatprep.subr.mxu0 0.0
  %625 = vmatpush2.msra.mxu0 0.0
  %626 = vmatprep.subr.mxu0 0.0
  %627 = vmatpush2.msra.mxu0 0.0
  %628 = vmatprep.subr.mxu0 0.0
  %629 = vmatpush2.msra.mxu0 0.0
  %630 = vmatprep.subr.mxu0 0.0
  %631 = vmatpush2.msra.mxu0 0.0
  %632 = vmatprep.subr.mxu0 0.0
  %633 = vmatpush2.msra.mxu0 0.0
  %634 = vmatprep.subr.mxu0 0.0
  %635 = vmatpush2.msra.mxu0 0.0
  %636 = vmatprep.subr.mxu0 0.0
  %637 = vmatpush2.msra.mxu0 0.0
  %638 = vmatprep.subr.mxu0 0.0
  %639 = vmatpush2.msra.mxu0 0.0
  %640 = vmatprep.subr.mxu0 0.0
  %641 = vmatpush2.msra.mxu0 0.0
  %642 = vmatprep.subr.mxu0 0.0
  %643 = vmatpush2.msra.mxu0 0.0
  %644 = vmatprep.mubr.f32.mxu0 0.0
  %645 = vmatmul.mubr.f32.gmra.mxu0 %v507
  %v646 = vpop.f32.mrf.mxu0
  %v647 = vadd.f32 %v227, %v646
  %v648 = vpop.f32.mrf.mxu0
  %649 = vdwg.mxu0
  %v650 = vadd.f32 %v576, %v186
  %v651 = vxor.u32 %v650, 2147483648
  %v652 = vmul.f32 %v651, 1.442695
  %v653 = vpow.pop %v652
  %v654 = vadd.f32 %v653, 1.0
  %v655 = vrcp.pop %v654
  %v656 = vmul.f32 1.0, %v655
  %658 = vrot.lane.b32.xlu0 %v650, 32
  %v659 = vpop.permute.xlu0 %658
  %v661 = vmul.f32 %v656, %v659
  %663 = vrot.lane.b32.xlu0 %v661, 64
  %v664 = vpop.permute.xlu0 %663
  %v666 = vadd.f32 %v650, %v664
  %v667 = vtanh.pop %v666
  %v668 = vsub.f32 1.0, %v656
  %670 = vrot.lane.b32.xlu0 %v667, 96
  %v671 = vpop.permute.xlu0 %670
  %v673 = vmul.f32 %v668, %v671
  %v674 = vmul.f32 %v656, %v474
  %v675 = vadd.f32 %v673, %v674
  %v676 = vxor.u32 %v578, 2147483648
  %v677 = vmul.f32 %v676, 1.442695
  %v678 = vpow.pop %v677
  %v679 = vadd.f32 %v678, 1.0
  %v680 = vrcp.pop %v679
  %v681 = vmul.f32 1.0, %v680
  %683 = vrot.lane.b32.xlu0 %v578, 32
  %v684 = vpop.permute.xlu0 %683
  %v686 = vmul.f32 %v681, %v684
  %688 = vrot.lane.b32.xlu0 %v686, 64
  %v689 = vpop.permute.xlu0 %688
  %v691 = vadd.f32 %v578, %v689
  %v692 = vtanh.pop %v691
  %v693 = vsub.f32 1.0, %v681
  %695 = vrot.lane.b32.xlu0 %v692, 96
  %v696 = vpop.permute.xlu0 %695
  %v698 = vmul.f32 %v693, %v696
  %v699 = vmul.f32 %v681, %v499
  %v700 = vadd.f32 %v698, %v699
  %v701 = vxor.u32 %v647, 2147483648
  %v702 = vmul.f32 %v701, 1.442695
  %v703 = vpow.pop %v702
  %v704 = vadd.f32 %v703, 1.0
  %v705 = vrcp.pop %v704
  %v706 = vmul.f32 1.0, %v705
  %708 = vrot.lane.b32.xlu0 %v647, 32
  %v709 = vpop.permute.xlu0 %708
  %v711 = vmul.f32 %v706, %v709
  %713 = vrot.lane.b32.xlu0 %v711, 64
  %v714 = vpop.permute.xlu0 %713
  %v716 = vadd.f32 %v647, %v714
  %v717 = vtanh.pop %v716
  %v718 = vsub.f32 1.0, %v706
  %720 = vrot.lane.b32.xlu0 %v717, 96
  %v721 = vpop.permute.xlu0 %720
  %v723 = vmul.f32 %v718, %v721
  %v724 = vmul.f32 %v706, 0.0
  %v725 = vadd.f32 %v723, %v724
  %727 = vrot.lane.b32.xlu0 %v675, 96
  %v728 = vpop.permute.xlu0 %727
  %731 = vrot.lane.b32.xlu0 %v725, 32
  %v732 = vpop.permute.xlu0 %731
  %v734 = vsel %vm371, %v728, %v700
  %v735 = vsel %vm373, %v734, %v732
  %v737 = vsel %vm267, %v735, 0
  %739 = vmatprep.subr.mxu0 0.0
  %740 = vmatpush1.msra.mxu0 0.0
  %741 = vmatprep.subr.mxu0 0.0
  %742 = vmatpush1.msra.mxu0 0.0
  %743 = vmatprep.subr.mxu0 0.0
  %744 = vmatpush1.msra.mxu0 0.0
  %745 = vmatprep.subr.mxu0 0.0
  %746 = vmatpush1.msra.mxu0 0.0
  %747 = vmatprep.subr.mxu0 %v265
  %748 = vmatpush1.msra.mxu0 %v264
  %749 = vmatprep.subr.mxu0 %v262
  %750 = vmatpush1.msra.mxu0 %v261
  %751 = vmatprep.subr.mxu0 %v259
  %752 = vmatpush1.msra.mxu0 %v258
  %753 = vmatprep.subr.mxu0 %v256
  %754 = vmatpush1.msra.mxu0 %v255
  %755 = vmatprep.subr.mxu0 %v253
  %756 = vmatpush1.msra.mxu0 %v252
  %757 = vmatprep.subr.mxu0 %v250
  %758 = vmatpush1.msra.mxu0 %v249
  %759 = vmatprep.subr.mxu0 %v247
  %760 = vmatpush1.msra.mxu0 %v246
  %761 = vmatprep.subr.mxu0 %v244
  %762 = vmatpush1.msra.mxu0 %v243
  %763 = vmatprep.subr.mxu0 %v241
  %764 = vmatpush1.msra.mxu0 %v240
  %765 = vmatprep.subr.mxu0 %v238
  %766 = vmatpush1.msra.mxu0 %v237
  %767 = vmatprep.subr.mxu0 %v235
  %768 = vmatpush1.msra.mxu0 %v234
  %769 = vmatprep.subr.mxu0 %v232
  %770 = vmatpush1.msra.mxu0 %v231
  %771 = vmatprep.subr.mxu0 0.0
  %772 = vmatpush2.msra.mxu0 0.0
  %773 = vmatprep.subr.mxu0 0.0
  %774 = vmatpush2.msra.mxu0 0.0
  %775 = vmatprep.subr.mxu0 0.0
  %776 = vmatpush2.msra.mxu0 0.0
  %777 = vmatprep.subr.mxu0 0.0
  %778 = vmatpush2.msra.mxu0 0.0
  %779 = vmatprep.subr.mxu0 0.0
  %780 = vmatpush2.msra.mxu0 0.0
  %781 = vmatprep.subr.mxu0 0.0
  %782 = vmatpush2.msra.mxu0 0.0
  %783 = vmatprep.subr.mxu0 0.0
  %784 = vmatpush2.msra.mxu0 0.0
  %785 = vmatprep.subr.mxu0 0.0
  %786 = vmatpush2.msra.mxu0 0.0
  %787 = vmatprep.subr.mxu0 0.0
  %788 = vmatpush2.msra.mxu0 0.0
  %789 = vmatprep.subr.mxu0 0.0
  %790 = vmatpush2.msra.mxu0 0.0
  %791 = vmatprep.subr.mxu0 0.0
  %792 = vmatpush2.msra.mxu0 0.0
  %793 = vmatprep.subr.mxu0 0.0
  %794 = vmatpush2.msra.mxu0 0.0
  %795 = vmatprep.subr.mxu0 0.0
  %796 = vmatpush2.msra.mxu0 0.0
  %797 = vmatprep.subr.mxu0 0.0
  %798 = vmatpush2.msra.mxu0 0.0
  %799 = vmatprep.subr.mxu0 0.0
  %800 = vmatpush2.msra.mxu0 0.0
  %801 = vmatprep.subr.mxu0 0.0
  %802 = vmatpush2.msra.mxu0 0.0
  %803 = vmatprep.mubr.f32.mxu0 0.0
  %804 = vmatmul.mubr.f32.gmra.mxu0 %v737
  %v805 = vpop.f32.mrf.mxu0
  %v806 = vadd.f32 %v219, %v805
  %v807 = vpop.f32.mrf.mxu0
  %v808 = vadd.f32 %v223, %v807
  %809 = vdwg.mxu0
  %810 = vmatprep.subr.mxu0 0.0
  %811 = vmatpush1.msra.mxu0 0.0
  %812 = vmatprep.subr.mxu0 0.0
  %813 = vmatpush1.msra.mxu0 0.0
  %814 = vmatprep.subr.mxu0 0.0
  %815 = vmatpush1.msra.mxu0 0.0
  %816 = vmatprep.subr.mxu0 0.0
  %817 = vmatpush1.msra.mxu0 0.0
  %818 = vmatprep.subr.mxu0 0.0
  %819 = vmatpush1.msra.mxu0 %v266
  %820 = vmatprep.subr.mxu0 0.0
  %821 = vmatpush1.msra.mxu0 %v263
  %822 = vmatprep.subr.mxu0 0.0
  %823 = vmatpush1.msra.mxu0 %v260
  %824 = vmatprep.subr.mxu0 0.0
  %825 = vmatpush1.msra.mxu0 %v257
  %826 = vmatprep.subr.mxu0 0.0
  %827 = vmatpush1.msra.mxu0 %v254
  %828 = vmatprep.subr.mxu0 0.0
  %829 = vmatpush1.msra.mxu0 %v251
  %830 = vmatprep.subr.mxu0 0.0
  %831 = vmatpush1.msra.mxu0 %v248
  %832 = vmatprep.subr.mxu0 0.0
  %833 = vmatpush1.msra.mxu0 %v245
  %834 = vmatprep.subr.mxu0 0.0
  %835 = vmatpush1.msra.mxu0 %v242
  %836 = vmatprep.subr.mxu0 0.0
  %837 = vmatpush1.msra.mxu0 %v239
  %838 = vmatprep.subr.mxu0 0.0
  %839 = vmatpush1.msra.mxu0 %v236
  %840 = vmatprep.subr.mxu0 0.0
  %841 = vmatpush1.msra.mxu0 %v233
  %842 = vmatprep.subr.mxu0 0.0
  %843 = vmatpush2.msra.mxu0 0.0
  %844 = vmatprep.subr.mxu0 0.0
  %845 = vmatpush2.msra.mxu0 0.0
  %846 = vmatprep.subr.mxu0 0.0
  %847 = vmatpush2.msra.mxu0 0.0
  %848 = vmatprep.subr.mxu0 0.0
  %849 = vmatpush2.msra.mxu0 0.0
  %850 = vmatprep.subr.mxu0 0.0
  %851 = vmatpush2.msra.mxu0 0.0
  %852 = vmatprep.subr.mxu0 0.0
  %853 = vmatpush2.msra.mxu0 0.0
  %854 = vmatprep.subr.mxu0 0.0
  %855 = vmatpush2.msra.mxu0 0.0
  %856 = vmatprep.subr.mxu0 0.0
  %857 = vmatpush2.msra.mxu0 0.0
  %858 = vmatprep.subr.mxu0 0.0
  %859 = vmatpush2.msra.mxu0 0.0
  %860 = vmatprep.subr.mxu0 0.0
  %861 = vmatpush2.msra.mxu0 0.0
  %862 = vmatprep.subr.mxu0 0.0
  %863 = vmatpush2.msra.mxu0 0.0
  %864 = vmatprep.subr.mxu0 0.0
  %865 = vmatpush2.msra.mxu0 0.0
  %866 = vmatprep.subr.mxu0 0.0
  %867 = vmatpush2.msra.mxu0 0.0
  %868 = vmatprep.subr.mxu0 0.0
  %869 = vmatpush2.msra.mxu0 0.0
  %870 = vmatprep.subr.mxu0 0.0
  %871 = vmatpush2.msra.mxu0 0.0
  %872 = vmatprep.subr.mxu0 0.0
  %873 = vmatpush2.msra.mxu0 0.0
  %874 = vmatprep.mubr.f32.mxu0 0.0
  %875 = vmatmul.mubr.f32.gmra.mxu0 %v737
  %v876 = vpop.f32.mrf.mxu0
  %v877 = vadd.f32 %v227, %v876
  %v878 = vpop.f32.mrf.mxu0
  %879 = vdwg.mxu0
  %v880 = vadd.f32 %v806, %v191
  %v881 = vxor.u32 %v880, 2147483648
  %v882 = vmul.f32 %v881, 1.442695
  %v883 = vpow.pop %v882
  %v884 = vadd.f32 %v883, 1.0
  %v885 = vrcp.pop %v884
  %v886 = vmul.f32 1.0, %v885
  %888 = vrot.lane.b32.xlu0 %v880, 32
  %v889 = vpop.permute.xlu0 %888
  %v891 = vmul.f32 %v886, %v889
  %893 = vrot.lane.b32.xlu0 %v891, 64
  %v894 = vpop.permute.xlu0 %893
  %v896 = vadd.f32 %v880, %v894
  %v897 = vtanh.pop %v896
  %v898 = vsub.f32 1.0, %v886
  %900 = vrot.lane.b32.xlu0 %v897, 96
  %v901 = vpop.permute.xlu0 %900
  %v903 = vmul.f32 %v898, %v901
  %v904 = vmul.f32 %v886, %v675
  %v905 = vadd.f32 %v903, %v904
  %v906 = vxor.u32 %v808, 2147483648
  %v907 = vmul.f32 %v906, 1.442695
  %v908 = vpow.pop %v907
  %v909 = vadd.f32 %v908, 1.0
  %v910 = vrcp.pop %v909
  %v911 = vmul.f32 1.0, %v910
  %913 = vrot.lane.b32.xlu0 %v808, 32
  %v914 = vpop.permute.xlu0 %913
  %v916 = vmul.f32 %v911, %v914
  %918 = vrot.lane.b32.xlu0 %v916, 64
  %v919 = vpop.permute.xlu0 %918
  %v921 = vadd.f32 %v808, %v919
  %v922 = vtanh.pop %v921
  %v923 = vsub.f32 1.0, %v911
  %925 = vrot.lane.b32.xlu0 %v922, 96
  %v926 = vpop.permute.xlu0 %925
  %v928 = vmul.f32 %v923, %v926
  %v929 = vmul.f32 %v911, %v700
  %v930 = vadd.f32 %v928, %v929
  %v931 = vxor.u32 %v877, 2147483648
  %v932 = vmul.f32 %v931, 1.442695
  %v933 = vpow.pop %v932
  %v934 = vadd.f32 %v933, 1.0
  %v935 = vrcp.pop %v934
  %v936 = vmul.f32 1.0, %v935
  %938 = vrot.lane.b32.xlu0 %v877, 32
  %v939 = vpop.permute.xlu0 %938
  %v941 = vmul.f32 %v936, %v939
  %943 = vrot.lane.b32.xlu0 %v941, 64
  %v944 = vpop.permute.xlu0 %943
  %v946 = vadd.f32 %v877, %v944
  %v947 = vtanh.pop %v946
  %v948 = vsub.f32 1.0, %v936
  %950 = vrot.lane.b32.xlu0 %v947, 96
  %v951 = vpop.permute.xlu0 %950
  %v953 = vmul.f32 %v948, %v951
  %v954 = vmul.f32 %v936, %v725
  %v955 = vadd.f32 %v953, %v954
  %957 = vrot.lane.b32.xlu0 %v905, 96
  %v958 = vpop.permute.xlu0 %957
  %961 = vrot.lane.b32.xlu0 %v955, 32
  %v962 = vpop.permute.xlu0 %961
  %v964 = vsel %vm371, %v958, %v930
  %v965 = vsel %vm373, %v964, %v962
  %v967 = vsel %vm267, %v965, 0
  %969 = vmatprep.subr.mxu0 0.0
  %970 = vmatpush1.msra.mxu0 0.0
  %971 = vmatprep.subr.mxu0 0.0
  %972 = vmatpush1.msra.mxu0 0.0
  %973 = vmatprep.subr.mxu0 0.0
  %974 = vmatpush1.msra.mxu0 0.0
  %975 = vmatprep.subr.mxu0 0.0
  %976 = vmatpush1.msra.mxu0 0.0
  %977 = vmatprep.subr.mxu0 %v265
  %978 = vmatpush1.msra.mxu0 %v264
  %979 = vmatprep.subr.mxu0 %v262
  %980 = vmatpush1.msra.mxu0 %v261
  %981 = vmatprep.subr.mxu0 %v259
  %982 = vmatpush1.msra.mxu0 %v258
  %983 = vmatprep.subr.mxu0 %v256
  %984 = vmatpush1.msra.mxu0 %v255
  %985 = vmatprep.subr.mxu0 %v253
  %986 = vmatpush1.msra.mxu0 %v252
  %987 = vmatprep.subr.mxu0 %v250
  %988 = vmatpush1.msra.mxu0 %v249
  %989 = vmatprep.subr.mxu0 %v247
  %990 = vmatpush1.msra.mxu0 %v246
  %991 = vmatprep.subr.mxu0 %v244
  %992 = vmatpush1.msra.mxu0 %v243
  %993 = vmatprep.subr.mxu0 %v241
  %994 = vmatpush1.msra.mxu0 %v240
  %995 = vmatprep.subr.mxu0 %v238
  %996 = vmatpush1.msra.mxu0 %v237
  %997 = vmatprep.subr.mxu0 %v235
  %998 = vmatpush1.msra.mxu0 %v234
  %999 = vmatprep.subr.mxu0 %v232
  %1000 = vmatpush1.msra.mxu0 %v231
  %1001 = vmatprep.subr.mxu0 0.0
  %1002 = vmatpush2.msra.mxu0 0.0
  %1003 = vmatprep.subr.mxu0 0.0
  %1004 = vmatpush2.msra.mxu0 0.0
  %1005 = vmatprep.subr.mxu0 0.0
  %1006 = vmatpush2.msra.mxu0 0.0
  %1007 = vmatprep.subr.mxu0 0.0
  %1008 = vmatpush2.msra.mxu0 0.0
  %1009 = vmatprep.subr.mxu0 0.0
  %1010 = vmatpush2.msra.mxu0 0.0
  %1011 = vmatprep.subr.mxu0 0.0
  %1012 = vmatpush2.msra.mxu0 0.0
  %1013 = vmatprep.subr.mxu0 0.0
  %1014 = vmatpush2.msra.mxu0 0.0
  %1015 = vmatprep.subr.mxu0 0.0
  %1016 = vmatpush2.msra.mxu0 0.0
  %1017 = vmatprep.subr.mxu0 0.0
  %1018 = vmatpush2.msra.mxu0 0.0
  %1019 = vmatprep.subr.mxu0 0.0
  %1020 = vmatpush2.msra.mxu0 0.0
  %1021 = vmatprep.subr.mxu0 0.0
  %1022 = vmatpush2.msra.mxu0 0.0
  %1023 = vmatprep.subr.mxu0 0.0
  %1024 = vmatpush2.msra.mxu0 0.0
  %1025 = vmatprep.subr.mxu0 0.0
  %1026 = vmatpush2.msra.mxu0 0.0
  %1027 = vmatprep.subr.mxu0 0.0
  %1028 = vmatpush2.msra.mxu0 0.0
  %1029 = vmatprep.subr.mxu0 0.0
  %1030 = vmatpush2.msra.mxu0 0.0
  %1031 = vmatprep.subr.mxu0 0.0
  %1032 = vmatpush2.msra.mxu0 0.0
  %1033 = vmatprep.mubr.f32.mxu0 0.0
  %1034 = vmatmul.mubr.f32.gmra.mxu0 %v967
  %v1035 = vpop.f32.mrf.mxu0
  %v1036 = vadd.f32 %v219, %v1035
  %v1037 = vpop.f32.mrf.mxu0
  %v1038 = vadd.f32 %v223, %v1037
  %1039 = vdwg.mxu0
  %1040 = vmatprep.subr.mxu0 0.0
  %1041 = vmatpush1.msra.mxu0 0.0
  %1042 = vmatprep.subr.mxu0 0.0
  %1043 = vmatpush1.msra.mxu0 0.0
  %1044 = vmatprep.subr.mxu0 0.0
  %1045 = vmatpush1.msra.mxu0 0.0
  %1046 = vmatprep.subr.mxu0 0.0
  %1047 = vmatpush1.msra.mxu0 0.0
  %1048 = vmatprep.subr.mxu0 0.0
  %1049 = vmatpush1.msra.mxu0 %v266
  %1050 = vmatprep.subr.mxu0 0.0
  %1051 = vmatpush1.msra.mxu0 %v263
  %1052 = vmatprep.subr.mxu0 0.0
  %1053 = vmatpush1.msra.mxu0 %v260
  %1054 = vmatprep.subr.mxu0 0.0
  %1055 = vmatpush1.msra.mxu0 %v257
  %1056 = vmatprep.subr.mxu0 0.0
  %1057 = vmatpush1.msra.mxu0 %v254
  %1058 = vmatprep.subr.mxu0 0.0
  %1059 = vmatpush1.msra.mxu0 %v251
  %1060 = vmatprep.subr.mxu0 0.0
  %1061 = vmatpush1.msra.mxu0 %v248
  %1062 = vmatprep.subr.mxu0 0.0
  %1063 = vmatpush1.msra.mxu0 %v245
  %1064 = vmatprep.subr.mxu0 0.0
  %1065 = vmatpush1.msra.mxu0 %v242
  %1066 = vmatprep.subr.mxu0 0.0
  %1067 = vmatpush1.msra.mxu0 %v239
  %1068 = vmatprep.subr.mxu0 0.0
  %1069 = vmatpush1.msra.mxu0 %v236
  %1070 = vmatprep.subr.mxu0 0.0
  %1071 = vmatpush1.msra.mxu0 %v233
  %1072 = vmatprep.subr.mxu0 0.0
  %1073 = vmatpush2.msra.mxu0 0.0
  %1074 = vmatprep.subr.mxu0 0.0
  %1075 = vmatpush2.msra.mxu0 0.0
  %1076 = vmatprep.subr.mxu0 0.0
  %1077 = vmatpush2.msra.mxu0 0.0
  %1078 = vmatprep.subr.mxu0 0.0
  %1079 = vmatpush2.msra.mxu0 0.0
  %1080 = vmatprep.subr.mxu0 0.0
  %1081 = vmatpush2.msra.mxu0 0.0
  %1082 = vmatprep.subr.mxu0 0.0
  %1083 = vmatpush2.msra.mxu0 0.0
  %1084 = vmatprep.subr.mxu0 0.0
  %1085 = vmatpush2.msra.mxu0 0.0
  %1086 = vmatprep.subr.mxu0 0.0
  %1087 = vmatpush2.msra.mxu0 0.0
  %1088 = vmatprep.subr.mxu0 0.0
  %1089 = vmatpush2.msra.mxu0 0.0
  %1090 = vmatprep.subr.mxu0 0.0
  %1091 = vmatpush2.msra.mxu0 0.0
  %1092 = vmatprep.subr.mxu0 0.0
  %1093 = vmatpush2.msra.mxu0 0.0
  %1094 = vmatprep.subr.mxu0 0.0
  %1095 = vmatpush2.msra.mxu0 0.0
  %1096 = vmatprep.subr.mxu0 0.0
  %1097 = vmatpush2.msra.mxu0 0.0
  %1098 = vmatprep.subr.mxu0 0.0
  %1099 = vmatpush2.msra.mxu0 0.0
  %1100 = vmatprep.subr.mxu0 0.0
  %1101 = vmatpush2.msra.mxu0 0.0
  %1102 = vmatprep.subr.mxu0 0.0
  %1103 = vmatpush2.msra.mxu0 0.0
  %1104 = vmatprep.mubr.f32.mxu0 0.0
  %1105 = vmatmul.mubr.f32.gmra.mxu0 %v967
  %v1106 = vpop.f32.mrf.mxu0
  %v1107 = vadd.f32 %v227, %v1106
  %v1108 = vpop.f32.mrf.mxu0
  %1109 = vdwg.mxu0
  %v1110 = vadd.f32 %v1036, %v196
  %v1111 = vxor.u32 %v1110, 2147483648
  %v1112 = vmul.f32 %v1111, 1.442695
  %v1113 = vpow.pop %v1112
  %v1114 = vadd.f32 %v1113, 1.0
  %v1115 = vrcp.pop %v1114
  %v1116 = vmul.f32 1.0, %v1115
  %1118 = vrot.lane.b32.xlu0 %v1110, 32
  %v1119 = vpop.permute.xlu0 %1118
  %v1121 = vmul.f32 %v1116, %v1119
  %1123 = vrot.lane.b32.xlu0 %v1121, 64
  %v1124 = vpop.permute.xlu0 %1123
  %v1126 = vadd.f32 %v1110, %v1124
  %v1127 = vtanh.pop %v1126
  %v1128 = vsub.f32 1.0, %v1116
  %1130 = vrot.lane.b32.xlu0 %v1127, 96
  %v1131 = vpop.permute.xlu0 %1130
  %v1133 = vmul.f32 %v1128, %v1131
  %v1134 = vmul.f32 %v1116, %v905
  %v1135 = vadd.f32 %v1133, %v1134
  %v1136 = vxor.u32 %v1038, 2147483648
  %v1137 = vmul.f32 %v1136, 1.442695
  %v1138 = vpow.pop %v1137
  %v1139 = vadd.f32 %v1138, 1.0
  %v1140 = vrcp.pop %v1139
  %v1141 = vmul.f32 1.0, %v1140
  %1143 = vrot.lane.b32.xlu0 %v1038, 32
  %v1144 = vpop.permute.xlu0 %1143
  %v1146 = vmul.f32 %v1141, %v1144
  %1148 = vrot.lane.b32.xlu0 %v1146, 64
  %v1149 = vpop.permute.xlu0 %1148
  %v1151 = vadd.f32 %v1038, %v1149
  %v1152 = vtanh.pop %v1151
  %v1153 = vsub.f32 1.0, %v1141
  %1155 = vrot.lane.b32.xlu0 %v1152, 96
  %v1156 = vpop.permute.xlu0 %1155
  %v1158 = vmul.f32 %v1153, %v1156
  %v1159 = vmul.f32 %v1141, %v930
  %v1160 = vadd.f32 %v1158, %v1159
  %v1161 = vxor.u32 %v1107, 2147483648
  %v1162 = vmul.f32 %v1161, 1.442695
  %v1163 = vpow.pop %v1162
  %v1164 = vadd.f32 %v1163, 1.0
  %v1165 = vrcp.pop %v1164
  %v1166 = vmul.f32 1.0, %v1165
  %1168 = vrot.lane.b32.xlu0 %v1107, 32
  %v1169 = vpop.permute.xlu0 %1168
  %v1171 = vmul.f32 %v1166, %v1169
  %1173 = vrot.lane.b32.xlu0 %v1171, 64
  %v1174 = vpop.permute.xlu0 %1173
  %v1176 = vadd.f32 %v1107, %v1174
  %v1177 = vtanh.pop %v1176
  %v1178 = vsub.f32 1.0, %v1166
  %1180 = vrot.lane.b32.xlu0 %v1177, 96
  %v1181 = vpop.permute.xlu0 %1180
  %v1183 = vmul.f32 %v1178, %v1181
  %v1184 = vmul.f32 %v1166, %v955
  %v1185 = vadd.f32 %v1183, %v1184
  %1187 = vrot.lane.b32.xlu0 %v1135, 96
  %v1188 = vpop.permute.xlu0 %1187
  %1191 = vrot.lane.b32.xlu0 %v1185, 32
  %v1192 = vpop.permute.xlu0 %1191
  %v1194 = vsel %vm371, %v1188, %v1160
  %v1195 = vsel %vm373, %v1194, %v1192
  %v1197 = vsel %vm267, %v1195, 0
  %1199 = vmatprep.subr.mxu0 0.0
  %1200 = vmatpush1.msra.mxu0 0.0
  %1201 = vmatprep.subr.mxu0 0.0
  %1202 = vmatpush1.msra.mxu0 0.0
  %1203 = vmatprep.subr.mxu0 0.0
  %1204 = vmatpush1.msra.mxu0 0.0
  %1205 = vmatprep.subr.mxu0 0.0
  %1206 = vmatpush1.msra.mxu0 0.0
  %1207 = vmatprep.subr.mxu0 %v265
  %1208 = vmatpush1.msra.mxu0 %v264
  %1209 = vmatprep.subr.mxu0 %v262
  %1210 = vmatpush1.msra.mxu0 %v261
  %1211 = vmatprep.subr.mxu0 %v259
  %1212 = vmatpush1.msra.mxu0 %v258
  %1213 = vmatprep.subr.mxu0 %v256
  %1214 = vmatpush1.msra.mxu0 %v255
  %1215 = vmatprep.subr.mxu0 %v253
  %1216 = vmatpush1.msra.mxu0 %v252
  %1217 = vmatprep.subr.mxu0 %v250
  %1218 = vmatpush1.msra.mxu0 %v249
  %1219 = vmatprep.subr.mxu0 %v247
  %1220 = vmatpush1.msra.mxu0 %v246
  %1221 = vmatprep.subr.mxu0 %v244
  %1222 = vmatpush1.msra.mxu0 %v243
  %1223 = vmatprep.subr.mxu0 %v241
  %1224 = vmatpush1.msra.mxu0 %v240
  %1225 = vmatprep.subr.mxu0 %v238
  %1226 = vmatpush1.msra.mxu0 %v237
  %1227 = vmatprep.subr.mxu0 %v235
  %1228 = vmatpush1.msra.mxu0 %v234
  %1229 = vmatprep.subr.mxu0 %v232
  %1230 = vmatpush1.msra.mxu0 %v231
  %1231 = vmatprep.subr.mxu0 0.0
  %1232 = vmatpush2.msra.mxu0 0.0
  %1233 = vmatprep.subr.mxu0 0.0
  %1234 = vmatpush2.msra.mxu0 0.0
  %1235 = vmatprep.subr.mxu0 0.0
  %1236 = vmatpush2.msra.mxu0 0.0
  %1237 = vmatprep.subr.mxu0 0.0
  %1238 = vmatpush2.msra.mxu0 0.0
  %1239 = vmatprep.subr.mxu0 0.0
  %1240 = vmatpush2.msra.mxu0 0.0
  %1241 = vmatprep.subr.mxu0 0.0
  %1242 = vmatpush2.msra.mxu0 0.0
  %1243 = vmatprep.subr.mxu0 0.0
  %1244 = vmatpush2.msra.mxu0 0.0
  %1245 = vmatprep.subr.mxu0 0.0
  %1246 = vmatpush2.msra.mxu0 0.0
  %1247 = vmatprep.subr.mxu0 0.0
  %1248 = vmatpush2.msra.mxu0 0.0
  %1249 = vmatprep.subr.mxu0 0.0
  %1250 = vmatpush2.msra.mxu0 0.0
  %1251 = vmatprep.subr.mxu0 0.0
  %1252 = vmatpush2.msra.mxu0 0.0
  %1253 = vmatprep.subr.mxu0 0.0
  %1254 = vmatpush2.msra.mxu0 0.0
  %1255 = vmatprep.subr.mxu0 0.0
  %1256 = vmatpush2.msra.mxu0 0.0
  %1257 = vmatprep.subr.mxu0 0.0
  %1258 = vmatpush2.msra.mxu0 0.0
  %1259 = vmatprep.subr.mxu0 0.0
  %1260 = vmatpush2.msra.mxu0 0.0
  %1261 = vmatprep.subr.mxu0 0.0
  %1262 = vmatpush2.msra.mxu0 0.0
  %1263 = vmatprep.mubr.f32.mxu0 0.0
  %1264 = vmatmul.mubr.f32.gmra.mxu0 %v1197
  %v1265 = vpop.f32.mrf.mxu0
  %v1266 = vadd.f32 %v219, %v1265
  %v1267 = vpop.f32.mrf.mxu0
  %v1268 = vadd.f32 %v223, %v1267
  %1269 = vdwg.mxu0
  %1270 = vmatprep.subr.mxu0 0.0
  %1271 = vmatpush1.msra.mxu0 0.0
  %1272 = vmatprep.subr.mxu0 0.0
  %1273 = vmatpush1.msra.mxu0 0.0
  %1274 = vmatprep.subr.mxu0 0.0
  %1275 = vmatpush1.msra.mxu0 0.0
  %1276 = vmatprep.subr.mxu0 0.0
  %1277 = vmatpush1.msra.mxu0 0.0
  %1278 = vmatprep.subr.mxu0 0.0
  %1279 = vmatpush1.msra.mxu0 %v266
  %1280 = vmatprep.subr.mxu0 0.0
  %1281 = vmatpush1.msra.mxu0 %v263
  %1282 = vmatprep.subr.mxu0 0.0
  %1283 = vmatpush1.msra.mxu0 %v260
  %1284 = vmatprep.subr.mxu0 0.0
  %1285 = vmatpush1.msra.mxu0 %v257
  %1286 = vmatprep.subr.mxu0 0.0
  %1287 = vmatpush1.msra.mxu0 %v254
  %1288 = vmatprep.subr.mxu0 0.0
  %1289 = vmatpush1.msra.mxu0 %v251
  %1290 = vmatprep.subr.mxu0 0.0
  %1291 = vmatpush1.msra.mxu0 %v248
  %1292 = vmatprep.subr.mxu0 0.0
  %1293 = vmatpush1.msra.mxu0 %v245
  %1294 = vmatprep.subr.mxu0 0.0
  %1295 = vmatpush1.msra.mxu0 %v242
  %1296 = vmatprep.subr.mxu0 0.0
  %1297 = vmatpush1.msra.mxu0 %v239
  %1298 = vmatprep.subr.mxu0 0.0
  %1299 = vmatpush1.msra.mxu0 %v236
  %1300 = vmatprep.subr.mxu0 0.0
  %1301 = vmatpush1.msra.mxu0 %v233
  %1302 = vmatprep.subr.mxu0 0.0
  %1303 = vmatpush2.msra.mxu0 0.0
  %1304 = vmatprep.subr.mxu0 0.0
  %1305 = vmatpush2.msra.mxu0 0.0
  %1306 = vmatprep.subr.mxu0 0.0
  %1307 = vmatpush2.msra.mxu0 0.0
  %1308 = vmatprep.subr.mxu0 0.0
  %1309 = vmatpush2.msra.mxu0 0.0
  %1310 = vmatprep.subr.mxu0 0.0
  %1311 = vmatpush2.msra.mxu0 0.0
  %1312 = vmatprep.subr.mxu0 0.0
  %1313 = vmatpush2.msra.mxu0 0.0
  %1314 = vmatprep.subr.mxu0 0.0
  %1315 = vmatpush2.msra.mxu0 0.0
  %1316 = vmatprep.subr.mxu0 0.0
  %1317 = vmatpush2.msra.mxu0 0.0
  %1318 = vmatprep.subr.mxu0 0.0
  %1319 = vmatpush2.msra.mxu0 0.0
  %1320 = vmatprep.subr.mxu0 0.0
  %1321 = vmatpush2.msra.mxu0 0.0
  %1322 = vmatprep.subr.mxu0 0.0
  %1323 = vmatpush2.msra.mxu0 0.0
  %1324 = vmatprep.subr.mxu0 0.0
  %1325 = vmatpush2.msra.mxu0 0.0
  %1326 = vmatprep.subr.mxu0 0.0
  %1327 = vmatpush2.msra.mxu0 0.0
  %1328 = vmatprep.subr.mxu0 0.0
  %1329 = vmatpush2.msra.mxu0 0.0
  %1330 = vmatprep.subr.mxu0 0.0
  %1331 = vmatpush2.msra.mxu0 0.0
  %1332 = vmatprep.subr.mxu0 0.0
  %1333 = vmatpush2.msra.mxu0 0.0
  %1334 = vmatprep.mubr.f32.mxu0 0.0
  %1335 = vmatmul.mubr.f32.gmra.mxu0 %v1197
  %v1336 = vpop.f32.mrf.mxu0
  %v1337 = vadd.f32 %v227, %v1336
  %v1338 = vpop.f32.mrf.mxu0
  %1339 = vdwg.mxu0
  %v1340 = vadd.f32 %v1266, %v201
  %v1341 = vxor.u32 %v1340, 2147483648
  %v1342 = vmul.f32 %v1341, 1.442695
  %v1343 = vpow.pop %v1342
  %v1344 = vadd.f32 %v1343, 1.0
  %v1345 = vrcp.pop %v1344
  %v1346 = vmul.f32 1.0, %v1345
  %1348 = vrot.lane.b32.xlu0 %v1340, 32
  %v1349 = vpop.permute.xlu0 %1348
  %v1351 = vmul.f32 %v1346, %v1349
  %1353 = vrot.lane.b32.xlu0 %v1351, 64
  %v1354 = vpop.permute.xlu0 %1353
  %v1356 = vadd.f32 %v1340, %v1354
  %v1357 = vtanh.pop %v1356
  %v1358 = vsub.f32 1.0, %v1346
  %1360 = vrot.lane.b32.xlu0 %v1357, 96
  %v1361 = vpop.permute.xlu0 %1360
  %v1363 = vmul.f32 %v1358, %v1361
  %v1364 = vmul.f32 %v1346, %v1135
  %v1365 = vadd.f32 %v1363, %v1364
  %v1366 = vxor.u32 %v1268, 2147483648
  %v1367 = vmul.f32 %v1366, 1.442695
  %v1368 = vpow.pop %v1367
  %v1369 = vadd.f32 %v1368, 1.0
  %v1370 = vrcp.pop %v1369
  %v1371 = vmul.f32 1.0, %v1370
  %1373 = vrot.lane.b32.xlu0 %v1268, 32
  %v1374 = vpop.permute.xlu0 %1373
  %v1376 = vmul.f32 %v1371, %v1374
  %1378 = vrot.lane.b32.xlu0 %v1376, 64
  %v1379 = vpop.permute.xlu0 %1378
  %v1381 = vadd.f32 %v1268, %v1379
  %v1382 = vtanh.pop %v1381
  %v1383 = vsub.f32 1.0, %v1371
  %1385 = vrot.lane.b32.xlu0 %v1382, 96
  %v1386 = vpop.permute.xlu0 %1385
  %v1388 = vmul.f32 %v1383, %v1386
  %v1389 = vmul.f32 %v1371, %v1160
  %v1390 = vadd.f32 %v1388, %v1389
  %v1391 = vxor.u32 %v1337, 2147483648
  %v1392 = vmul.f32 %v1391, 1.442695
  %v1393 = vpow.pop %v1392
  %v1394 = vadd.f32 %v1393, 1.0
  %v1395 = vrcp.pop %v1394
  %v1396 = vmul.f32 1.0, %v1395
  %1398 = vrot.lane.b32.xlu0 %v1337, 32
  %v1399 = vpop.permute.xlu0 %1398
  %v1401 = vmul.f32 %v1396, %v1399
  %1403 = vrot.lane.b32.xlu0 %v1401, 64
  %v1404 = vpop.permute.xlu0 %1403
  %v1406 = vadd.f32 %v1337, %v1404
  %v1407 = vtanh.pop %v1406
  %v1408 = vsub.f32 1.0, %v1396
  %1410 = vrot.lane.b32.xlu0 %v1407, 96
  %v1411 = vpop.permute.xlu0 %1410
  %v1413 = vmul.f32 %v1408, %v1411
  %v1414 = vmul.f32 %v1396, %v1185
  %v1415 = vadd.f32 %v1413, %v1414
  %1417 = vrot.lane.b32.xlu0 %v1365, 96
  %v1418 = vpop.permute.xlu0 %1417
  %1421 = vrot.lane.b32.xlu0 %v1415, 32
  %v1422 = vpop.permute.xlu0 %1421
  %v1424 = vsel %vm371, %v1418, %v1390
  %v1425 = vsel %vm373, %v1424, %v1422
  %v1427 = vsel %vm267, %v1425, 0
  %1429 = vmatprep.subr.mxu0 0.0
  %1430 = vmatpush1.msra.mxu0 0.0
  %1431 = vmatprep.subr.mxu0 0.0
  %1432 = vmatpush1.msra.mxu0 0.0
  %1433 = vmatprep.subr.mxu0 0.0
  %1434 = vmatpush1.msra.mxu0 0.0
  %1435 = vmatprep.subr.mxu0 0.0
  %1436 = vmatpush1.msra.mxu0 0.0
  %1437 = vmatprep.subr.mxu0 %v265
  %1438 = vmatpush1.msra.mxu0 %v264
  %1439 = vmatprep.subr.mxu0 %v262
  %1440 = vmatpush1.msra.mxu0 %v261
  %1441 = vmatprep.subr.mxu0 %v259
  %1442 = vmatpush1.msra.mxu0 %v258
  %1443 = vmatprep.subr.mxu0 %v256
  %1444 = vmatpush1.msra.mxu0 %v255
  %1445 = vmatprep.subr.mxu0 %v253
  %1446 = vmatpush1.msra.mxu0 %v252
  %1447 = vmatprep.subr.mxu0 %v250
  %1448 = vmatpush1.msra.mxu0 %v249
  %1449 = vmatprep.subr.mxu0 %v247
  %1450 = vmatpush1.msra.mxu0 %v246
  %1451 = vmatprep.subr.mxu0 %v244
  %1452 = vmatpush1.msra.mxu0 %v243
  %1453 = vmatprep.subr.mxu0 %v241
  %1454 = vmatpush1.msra.mxu0 %v240
  %1455 = vmatprep.subr.mxu0 %v238
  %1456 = vmatpush1.msra.mxu0 %v237
  %1457 = vmatprep.subr.mxu0 %v235
  %1458 = vmatpush1.msra.mxu0 %v234
  %1459 = vmatprep.subr.mxu0 %v232
  %1460 = vmatpush1.msra.mxu0 %v231
  %1461 = vmatprep.subr.mxu0 0.0
  %1462 = vmatpush2.msra.mxu0 0.0
  %1463 = vmatprep.subr.mxu0 0.0
  %1464 = vmatpush2.msra.mxu0 0.0
  %1465 = vmatprep.subr.mxu0 0.0
  %1466 = vmatpush2.msra.mxu0 0.0
  %1467 = vmatprep.subr.mxu0 0.0
  %1468 = vmatpush2.msra.mxu0 0.0
  %1469 = vmatprep.subr.mxu0 0.0
  %1470 = vmatpush2.msra.mxu0 0.0
  %1471 = vmatprep.subr.mxu0 0.0
  %1472 = vmatpush2.msra.mxu0 0.0
  %1473 = vmatprep.subr.mxu0 0.0
  %1474 = vmatpush2.msra.mxu0 0.0
  %1475 = vmatprep.subr.mxu0 0.0
  %1476 = vmatpush2.msra.mxu0 0.0
  %1477 = vmatprep.subr.mxu0 0.0
  %1478 = vmatpush2.msra.mxu0 0.0
  %1479 = vmatprep.subr.mxu0 0.0
  %1480 = vmatpush2.msra.mxu0 0.0
  %1481 = vmatprep.subr.mxu0 0.0
  %1482 = vmatpush2.msra.mxu0 0.0
  %1483 = vmatprep.subr.mxu0 0.0
  %1484 = vmatpush2.msra.mxu0 0.0
  %1485 = vmatprep.subr.mxu0 0.0
  %1486 = vmatpush2.msra.mxu0 0.0
  %1487 = vmatprep.subr.mxu0 0.0
  %1488 = vmatpush2.msra.mxu0 0.0
  %1489 = vmatprep.subr.mxu0 0.0
  %1490 = vmatpush2.msra.mxu0 0.0
  %1491 = vmatprep.subr.mxu0 0.0
  %1492 = vmatpush2.msra.mxu0 0.0
  %1493 = vmatprep.mubr.f32.mxu0 0.0
  %1494 = vmatmul.mubr.f32.gmra.mxu0 %v1427
  %v1495 = vpop.f32.mrf.mxu0
  %v1496 = vadd.f32 %v219, %v1495
  %v1497 = vpop.f32.mrf.mxu0
  %v1498 = vadd.f32 %v223, %v1497
  %1499 = vdwg.mxu0
  %1500 = vmatprep.subr.mxu0 0.0
  %1501 = vmatpush1.msra.mxu0 0.0
  %1502 = vmatprep.subr.mxu0 0.0
  %1503 = vmatpush1.msra.mxu0 0.0
  %1504 = vmatprep.subr.mxu0 0.0
  %1505 = vmatpush1.msra.mxu0 0.0
  %1506 = vmatprep.subr.mxu0 0.0
  %1507 = vmatpush1.msra.mxu0 0.0
  %1508 = vmatprep.subr.mxu0 0.0
  %1509 = vmatpush1.msra.mxu0 %v266
  %1510 = vmatprep.subr.mxu0 0.0
  %1511 = vmatpush1.msra.mxu0 %v263
  %1512 = vmatprep.subr.mxu0 0.0
  %1513 = vmatpush1.msra.mxu0 %v260
  %1514 = vmatprep.subr.mxu0 0.0
  %1515 = vmatpush1.msra.mxu0 %v257
  %1516 = vmatprep.subr.mxu0 0.0
  %1517 = vmatpush1.msra.mxu0 %v254
  %1518 = vmatprep.subr.mxu0 0.0
  %1519 = vmatpush1.msra.mxu0 %v251
  %1520 = vmatprep.subr.mxu0 0.0
  %1521 = vmatpush1.msra.mxu0 %v248
  %1522 = vmatprep.subr.mxu0 0.0
  %1523 = vmatpush1.msra.mxu0 %v245
  %1524 = vmatprep.subr.mxu0 0.0
  %1525 = vmatpush1.msra.mxu0 %v242
  %1526 = vmatprep.subr.mxu0 0.0
  %1527 = vmatpush1.msra.mxu0 %v239
  %1528 = vmatprep.subr.mxu0 0.0
  %1529 = vmatpush1.msra.mxu0 %v236
  %1530 = vmatprep.subr.mxu0 0.0
  %1531 = vmatpush1.msra.mxu0 %v233
  %1532 = vmatprep.subr.mxu0 0.0
  %1533 = vmatpush2.msra.mxu0 0.0
  %1534 = vmatprep.subr.mxu0 0.0
  %1535 = vmatpush2.msra.mxu0 0.0
  %1536 = vmatprep.subr.mxu0 0.0
  %1537 = vmatpush2.msra.mxu0 0.0
  %1538 = vmatprep.subr.mxu0 0.0
  %1539 = vmatpush2.msra.mxu0 0.0
  %1540 = vmatprep.subr.mxu0 0.0
  %1541 = vmatpush2.msra.mxu0 0.0
  %1542 = vmatprep.subr.mxu0 0.0
  %1543 = vmatpush2.msra.mxu0 0.0
  %1544 = vmatprep.subr.mxu0 0.0
  %1545 = vmatpush2.msra.mxu0 0.0
  %1546 = vmatprep.subr.mxu0 0.0
  %1547 = vmatpush2.msra.mxu0 0.0
  %1548 = vmatprep.subr.mxu0 0.0
  %1549 = vmatpush2.msra.mxu0 0.0
  %1550 = vmatprep.subr.mxu0 0.0
  %1551 = vmatpush2.msra.mxu0 0.0
  %1552 = vmatprep.subr.mxu0 0.0
  %1553 = vmatpush2.msra.mxu0 0.0
  %1554 = vmatprep.subr.mxu0 0.0
  %1555 = vmatpush2.msra.mxu0 0.0
  %1556 = vmatprep.subr.mxu0 0.0
  %1557 = vmatpush2.msra.mxu0 0.0
  %1558 = vmatprep.subr.mxu0 0.0
  %1559 = vmatpush2.msra.mxu0 0.0
  %1560 = vmatprep.subr.mxu0 0.0
  %1561 = vmatpush2.msra.mxu0 0.0
  %1562 = vmatprep.subr.mxu0 0.0
  %1563 = vmatpush2.msra.mxu0 0.0
  %1564 = vmatprep.mubr.f32.mxu0 0.0
  %1565 = vmatmul.mubr.f32.gmra.mxu0 %v1427
  %v1566 = vpop.f32.mrf.mxu0
  %v1567 = vadd.f32 %v227, %v1566
  %v1568 = vpop.f32.mrf.mxu0
  %1569 = vdwg.mxu0
  %v1570 = vadd.f32 %v1496, %v206
  %v1571 = vxor.u32 %v1570, 2147483648
  %v1572 = vmul.f32 %v1571, 1.442695
  %v1573 = vpow.pop %v1572
  %v1574 = vadd.f32 %v1573, 1.0
  %v1575 = vrcp.pop %v1574
  %v1576 = vmul.f32 1.0, %v1575
  %1578 = vrot.lane.b32.xlu0 %v1570, 32
  %v1579 = vpop.permute.xlu0 %1578
  %v1581 = vmul.f32 %v1576, %v1579
  %1583 = vrot.lane.b32.xlu0 %v1581, 64
  %v1584 = vpop.permute.xlu0 %1583
  %v1586 = vadd.f32 %v1570, %v1584
  %v1587 = vtanh.pop %v1586
  %v1588 = vsub.f32 1.0, %v1576
  %1590 = vrot.lane.b32.xlu0 %v1587, 96
  %v1591 = vpop.permute.xlu0 %1590
  %v1593 = vmul.f32 %v1588, %v1591
  %v1594 = vmul.f32 %v1576, %v1365
  %v1595 = vadd.f32 %v1593, %v1594
  %v1596 = vxor.u32 %v1498, 2147483648
  %v1597 = vmul.f32 %v1596, 1.442695
  %v1598 = vpow.pop %v1597
  %v1599 = vadd.f32 %v1598, 1.0
  %v1600 = vrcp.pop %v1599
  %v1601 = vmul.f32 1.0, %v1600
  %1603 = vrot.lane.b32.xlu0 %v1498, 32
  %v1604 = vpop.permute.xlu0 %1603
  %v1606 = vmul.f32 %v1601, %v1604
  %1608 = vrot.lane.b32.xlu0 %v1606, 64
  %v1609 = vpop.permute.xlu0 %1608
  %v1611 = vadd.f32 %v1498, %v1609
  %v1612 = vtanh.pop %v1611
  %v1613 = vsub.f32 1.0, %v1601
  %1615 = vrot.lane.b32.xlu0 %v1612, 96
  %v1616 = vpop.permute.xlu0 %1615
  %v1618 = vmul.f32 %v1613, %v1616
  %v1619 = vmul.f32 %v1601, %v1390
  %v1620 = vadd.f32 %v1618, %v1619
  %v1621 = vxor.u32 %v1567, 2147483648
  %v1622 = vmul.f32 %v1621, 1.442695
  %v1623 = vpow.pop %v1622
  %v1624 = vadd.f32 %v1623, 1.0
  %v1625 = vrcp.pop %v1624
  %v1626 = vmul.f32 1.0, %v1625
  %1628 = vrot.lane.b32.xlu0 %v1567, 32
  %v1629 = vpop.permute.xlu0 %1628
  %v1631 = vmul.f32 %v1626, %v1629
  %1633 = vrot.lane.b32.xlu0 %v1631, 64
  %v1634 = vpop.permute.xlu0 %1633
  %v1636 = vadd.f32 %v1567, %v1634
  %v1637 = vtanh.pop %v1636
  %v1638 = vsub.f32 1.0, %v1626
  %1640 = vrot.lane.b32.xlu0 %v1637, 96
  %v1641 = vpop.permute.xlu0 %1640
  %v1643 = vmul.f32 %v1638, %v1641
  %v1644 = vmul.f32 %v1626, %v1415
  %v1645 = vadd.f32 %v1643, %v1644
  %1647 = vrot.lane.b32.xlu0 %v1595, 96
  %v1648 = vpop.permute.xlu0 %1647
  %1651 = vrot.lane.b32.xlu0 %v1645, 32
  %v1652 = vpop.permute.xlu0 %1651
  %v1654 = vsel %vm371, %v1648, %v1620
  %v1655 = vsel %vm373, %v1654, %v1652
  %v1657 = vsel %vm267, %v1655, 0
  %1659 = vmatprep.subr.mxu0 0.0
  %1660 = vmatpush1.msra.mxu0 0.0
  %1661 = vmatprep.subr.mxu0 0.0
  %1662 = vmatpush1.msra.mxu0 0.0
  %1663 = vmatprep.subr.mxu0 0.0
  %1664 = vmatpush1.msra.mxu0 0.0
  %1665 = vmatprep.subr.mxu0 0.0
  %1666 = vmatpush1.msra.mxu0 0.0
  %1667 = vmatprep.subr.mxu0 %v265
  %1668 = vmatpush1.msra.mxu0 %v264
  %1669 = vmatprep.subr.mxu0 %v262
  %1670 = vmatpush1.msra.mxu0 %v261
  %1671 = vmatprep.subr.mxu0 %v259
  %1672 = vmatpush1.msra.mxu0 %v258
  %1673 = vmatprep.subr.mxu0 %v256
  %1674 = vmatpush1.msra.mxu0 %v255
  %1675 = vmatprep.subr.mxu0 %v253
  %1676 = vmatpush1.msra.mxu0 %v252
  %1677 = vmatprep.subr.mxu0 %v250
  %1678 = vmatpush1.msra.mxu0 %v249
  %1679 = vmatprep.subr.mxu0 %v247
  %1680 = vmatpush1.msra.mxu0 %v246
  %1681 = vmatprep.subr.mxu0 %v244
  %1682 = vmatpush1.msra.mxu0 %v243
  %1683 = vmatprep.subr.mxu0 %v241
  %1684 = vmatpush1.msra.mxu0 %v240
  %1685 = vmatprep.subr.mxu0 %v238
  %1686 = vmatpush1.msra.mxu0 %v237
  %1687 = vmatprep.subr.mxu0 %v235
  %1688 = vmatpush1.msra.mxu0 %v234
  %1689 = vmatprep.subr.mxu0 %v232
  %1690 = vmatpush1.msra.mxu0 %v231
  %1691 = vmatprep.subr.mxu0 0.0
  %1692 = vmatpush2.msra.mxu0 0.0
  %1693 = vmatprep.subr.mxu0 0.0
  %1694 = vmatpush2.msra.mxu0 0.0
  %1695 = vmatprep.subr.mxu0 0.0
  %1696 = vmatpush2.msra.mxu0 0.0
  %1697 = vmatprep.subr.mxu0 0.0
  %1698 = vmatpush2.msra.mxu0 0.0
  %1699 = vmatprep.subr.mxu0 0.0
  %1700 = vmatpush2.msra.mxu0 0.0
  %1701 = vmatprep.subr.mxu0 0.0
  %1702 = vmatpush2.msra.mxu0 0.0
  %1703 = vmatprep.subr.mxu0 0.0
  %1704 = vmatpush2.msra.mxu0 0.0
  %1705 = vmatprep.subr.mxu0 0.0
  %1706 = vmatpush2.msra.mxu0 0.0
  %1707 = vmatprep.subr.mxu0 0.0
  %1708 = vmatpush2.msra.mxu0 0.0
  %1709 = vmatprep.subr.mxu0 0.0
  %1710 = vmatpush2.msra.mxu0 0.0
  %1711 = vmatprep.subr.mxu0 0.0
  %1712 = vmatpush2.msra.mxu0 0.0
  %1713 = vmatprep.subr.mxu0 0.0
  %1714 = vmatpush2.msra.mxu0 0.0
  %1715 = vmatprep.subr.mxu0 0.0
  %1716 = vmatpush2.msra.mxu0 0.0
  %1717 = vmatprep.subr.mxu0 0.0
  %1718 = vmatpush2.msra.mxu0 0.0
  %1719 = vmatprep.subr.mxu0 0.0
  %1720 = vmatpush2.msra.mxu0 0.0
  %1721 = vmatprep.subr.mxu0 0.0
  %1722 = vmatpush2.msra.mxu0 0.0
  %1723 = vmatprep.mubr.f32.mxu0 0.0
  %1724 = vmatmul.mubr.f32.gmra.mxu0 %v1657
  %v1725 = vpop.f32.mrf.mxu0
  %v1726 = vadd.f32 %v219, %v1725
  %v1727 = vpop.f32.mrf.mxu0
  %v1728 = vadd.f32 %v223, %v1727
  %1729 = vdwg.mxu0
  %1730 = vmatprep.subr.mxu0 0.0
  %1731 = vmatpush1.msra.mxu0 0.0
  %1732 = vmatprep.subr.mxu0 0.0
  %1733 = vmatpush1.msra.mxu0 0.0
  %1734 = vmatprep.subr.mxu0 0.0
  %1735 = vmatpush1.msra.mxu0 0.0
  %1736 = vmatprep.subr.mxu0 0.0
  %1737 = vmatpush1.msra.mxu0 0.0
  %1738 = vmatprep.subr.mxu0 0.0
  %1739 = vmatpush1.msra.mxu0 %v266
  %1740 = vmatprep.subr.mxu0 0.0
  %1741 = vmatpush1.msra.mxu0 %v263
  %1742 = vmatprep.subr.mxu0 0.0
  %1743 = vmatpush1.msra.mxu0 %v260
  %1744 = vmatprep.subr.mxu0 0.0
  %1745 = vmatpush1.msra.mxu0 %v257
  %1746 = vmatprep.subr.mxu0 0.0
  %1747 = vmatpush1.msra.mxu0 %v254
  %1748 = vmatprep.subr.mxu0 0.0
  %1749 = vmatpush1.msra.mxu0 %v251
  %1750 = vmatprep.subr.mxu0 0.0
  %1751 = vmatpush1.msra.mxu0 %v248
  %1752 = vmatprep.subr.mxu0 0.0
  %1753 = vmatpush1.msra.mxu0 %v245
  %1754 = vmatprep.subr.mxu0 0.0
  %1755 = vmatpush1.msra.mxu0 %v242
  %1756 = vmatprep.subr.mxu0 0.0
  %1757 = vmatpush1.msra.mxu0 %v239
  %1758 = vmatprep.subr.mxu0 0.0
  %1759 = vmatpush1.msra.mxu0 %v236
  %1760 = vmatprep.subr.mxu0 0.0
  %1761 = vmatpush1.msra.mxu0 %v233
  %1762 = vmatprep.subr.mxu0 0.0
  %1763 = vmatpush2.msra.mxu0 0.0
  %1764 = vmatprep.subr.mxu0 0.0
  %1765 = vmatpush2.msra.mxu0 0.0
  %1766 = vmatprep.subr.mxu0 0.0
  %1767 = vmatpush2.msra.mxu0 0.0
  %1768 = vmatprep.subr.mxu0 0.0
  %1769 = vmatpush2.msra.mxu0 0.0
  %1770 = vmatprep.subr.mxu0 0.0
  %1771 = vmatpush2.msra.mxu0 0.0
  %1772 = vmatprep.subr.mxu0 0.0
  %1773 = vmatpush2.msra.mxu0 0.0
  %1774 = vmatprep.subr.mxu0 0.0
  %1775 = vmatpush2.msra.mxu0 0.0
  %1776 = vmatprep.subr.mxu0 0.0
  %1777 = vmatpush2.msra.mxu0 0.0
  %1778 = vmatprep.subr.mxu0 0.0
  %1779 = vmatpush2.msra.mxu0 0.0
  %1780 = vmatprep.subr.mxu0 0.0
  %1781 = vmatpush2.msra.mxu0 0.0
  %1782 = vmatprep.subr.mxu0 0.0
  %1783 = vmatpush2.msra.mxu0 0.0
  %1784 = vmatprep.subr.mxu0 0.0
  %1785 = vmatpush2.msra.mxu0 0.0
  %1786 = vmatprep.subr.mxu0 0.0
  %1787 = vmatpush2.msra.mxu0 0.0
  %1788 = vmatprep.subr.mxu0 0.0
  %1789 = vmatpush2.msra.mxu0 0.0
  %1790 = vmatprep.subr.mxu0 0.0
  %1791 = vmatpush2.msra.mxu0 0.0
  %1792 = vmatprep.subr.mxu0 0.0
  %1793 = vmatpush2.msra.mxu0 0.0
  %1794 = vmatprep.mubr.f32.mxu0 0.0
  %1795 = vmatmul.mubr.f32.gmra.mxu0 %v1657
  %v1796 = vpop.f32.mrf.mxu0
  %v1797 = vadd.f32 %v227, %v1796
  %v1798 = vpop.f32.mrf.mxu0
  %1799 = vdwg.mxu0
  %v1800 = vadd.f32 %v1726, %v211
  %v1801 = vxor.u32 %v1800, 2147483648
  %v1802 = vmul.f32 %v1801, 1.442695
  %v1803 = vpow.pop %v1802
  %v1804 = vadd.f32 %v1803, 1.0
  %v1805 = vrcp.pop %v1804
  %v1806 = vmul.f32 1.0, %v1805
  %1808 = vrot.lane.b32.xlu0 %v1800, 32
  %v1809 = vpop.permute.xlu0 %1808
  %v1811 = vmul.f32 %v1806, %v1809
  %1813 = vrot.lane.b32.xlu0 %v1811, 64
  %v1814 = vpop.permute.xlu0 %1813
  %v1816 = vadd.f32 %v1800, %v1814
  %v1817 = vtanh.pop %v1816
  %v1818 = vsub.f32 1.0, %v1806
  %1820 = vrot.lane.b32.xlu0 %v1817, 96
  %v1821 = vpop.permute.xlu0 %1820
  %v1823 = vmul.f32 %v1818, %v1821
  %v1824 = vmul.f32 %v1806, %v1595
  %v1825 = vadd.f32 %v1823, %v1824
  %v1826 = vxor.u32 %v1728, 2147483648
  %v1827 = vmul.f32 %v1826, 1.442695
  %v1828 = vpow.pop %v1827
  %v1829 = vadd.f32 %v1828, 1.0
  %v1830 = vrcp.pop %v1829
  %v1831 = vmul.f32 1.0, %v1830
  %1833 = vrot.lane.b32.xlu0 %v1728, 32
  %v1834 = vpop.permute.xlu0 %1833
  %v1836 = vmul.f32 %v1831, %v1834
  %1838 = vrot.lane.b32.xlu0 %v1836, 64
  %v1839 = vpop.permute.xlu0 %1838
  %v1841 = vadd.f32 %v1728, %v1839
  %v1842 = vtanh.pop %v1841
  %v1843 = vsub.f32 1.0, %v1831
  %1845 = vrot.lane.b32.xlu0 %v1842, 96
  %v1846 = vpop.permute.xlu0 %1845
  %v1848 = vmul.f32 %v1843, %v1846
  %v1849 = vmul.f32 %v1831, %v1620
  %v1850 = vadd.f32 %v1848, %v1849
  %v1851 = vxor.u32 %v1797, 2147483648
  %v1852 = vmul.f32 %v1851, 1.442695
  %v1853 = vpow.pop %v1852
  %v1854 = vadd.f32 %v1853, 1.0
  %v1855 = vrcp.pop %v1854
  %v1856 = vmul.f32 1.0, %v1855
  %1858 = vrot.lane.b32.xlu0 %v1797, 32
  %v1859 = vpop.permute.xlu0 %1858
  %v1861 = vmul.f32 %v1856, %v1859
  %1863 = vrot.lane.b32.xlu0 %v1861, 64
  %v1864 = vpop.permute.xlu0 %1863
  %v1866 = vadd.f32 %v1797, %v1864
  %v1867 = vtanh.pop %v1866
  %v1868 = vsub.f32 1.0, %v1856
  %1870 = vrot.lane.b32.xlu0 %v1867, 96
  %v1871 = vpop.permute.xlu0 %1870
  %v1873 = vmul.f32 %v1868, %v1871
  %v1874 = vmul.f32 %v1856, %v1645
  %v1875 = vadd.f32 %v1873, %v1874
  %1877 = vrot.lane.b32.xlu0 %v1825, 96
  %v1878 = vpop.permute.xlu0 %1877
  %1881 = vrot.lane.b32.xlu0 %v1875, 32
  %v1882 = vpop.permute.xlu0 %1881
  %v1884 = vsel %vm371, %v1878, %v1850
  %v1885 = vsel %vm373, %v1884, %v1882
  %v1887 = vsel %vm267, %v1885, 0
  %1889 = vmatprep.subr.mxu0 0.0
  %1890 = vmatpush1.msra.mxu0 0.0
  %1891 = vmatprep.subr.mxu0 0.0
  %1892 = vmatpush1.msra.mxu0 0.0
  %1893 = vmatprep.subr.mxu0 0.0
  %1894 = vmatpush1.msra.mxu0 0.0
  %1895 = vmatprep.subr.mxu0 0.0
  %1896 = vmatpush1.msra.mxu0 0.0
  %1897 = vmatprep.subr.mxu0 %v265
  %1898 = vmatpush1.msra.mxu0 %v264
  %1899 = vmatprep.subr.mxu0 %v262
  %1900 = vmatpush1.msra.mxu0 %v261
  %1901 = vmatprep.subr.mxu0 %v259
  %1902 = vmatpush1.msra.mxu0 %v258
  %1903 = vmatprep.subr.mxu0 %v256
  %1904 = vmatpush1.msra.mxu0 %v255
  %1905 = vmatprep.subr.mxu0 %v253
  %1906 = vmatpush1.msra.mxu0 %v252
  %1907 = vmatprep.subr.mxu0 %v250
  %1908 = vmatpush1.msra.mxu0 %v249
  %1909 = vmatprep.subr.mxu0 %v247
  %1910 = vmatpush1.msra.mxu0 %v246
  %1911 = vmatprep.subr.mxu0 %v244
  %1912 = vmatpush1.msra.mxu0 %v243
  %1913 = vmatprep.subr.mxu0 %v241
  %1914 = vmatpush1.msra.mxu0 %v240
  %1915 = vmatprep.subr.mxu0 %v238
  %1916 = vmatpush1.msra.mxu0 %v237
  %1917 = vmatprep.subr.mxu0 %v235
  %1918 = vmatpush1.msra.mxu0 %v234
  %1919 = vmatprep.subr.mxu0 %v232
  %1920 = vmatpush1.msra.mxu0 %v231
  %1921 = vmatprep.subr.mxu0 0.0
  %1922 = vmatpush2.msra.mxu0 0.0
  %1923 = vmatprep.subr.mxu0 0.0
  %1924 = vmatpush2.msra.mxu0 0.0
  %1925 = vmatprep.subr.mxu0 0.0
  %1926 = vmatpush2.msra.mxu0 0.0
  %1927 = vmatprep.subr.mxu0 0.0
  %1928 = vmatpush2.msra.mxu0 0.0
  %1929 = vmatprep.subr.mxu0 0.0
  %1930 = vmatpush2.msra.mxu0 0.0
  %1931 = vmatprep.subr.mxu0 0.0
  %1932 = vmatpush2.msra.mxu0 0.0
  %1933 = vmatprep.subr.mxu0 0.0
  %1934 = vmatpush2.msra.mxu0 0.0
  %1935 = vmatprep.subr.mxu0 0.0
  %1936 = vmatpush2.msra.mxu0 0.0
  %1937 = vmatprep.subr.mxu0 0.0
  %1938 = vmatpush2.msra.mxu0 0.0
  %1939 = vmatprep.subr.mxu0 0.0
  %1940 = vmatpush2.msra.mxu0 0.0
  %1941 = vmatprep.subr.mxu0 0.0
  %1942 = vmatpush2.msra.mxu0 0.0
  %1943 = vmatprep.subr.mxu0 0.0
  %1944 = vmatpush2.msra.mxu0 0.0
  %1945 = vmatprep.subr.mxu0 0.0
  %1946 = vmatpush2.msra.mxu0 0.0
  %1947 = vmatprep.subr.mxu0 0.0
  %1948 = vmatpush2.msra.mxu0 0.0
  %1949 = vmatprep.subr.mxu0 0.0
  %1950 = vmatpush2.msra.mxu0 0.0
  %1951 = vmatprep.subr.mxu0 0.0
  %1952 = vmatpush2.msra.mxu0 0.0
  %1953 = vmatprep.mubr.f32.mxu0 0.0
  %1954 = vmatmul.mubr.f32.gmra.mxu0 %v1887
  %v1955 = vpop.f32.mrf.mxu0
  %v1956 = vpop.f32.mrf.mxu0
  %v1957 = vadd.f32 %v223, %v1956
  %1958 = vdwg.mxu0
  %1959 = vmatprep.subr.mxu0 0.0
  %1960 = vmatpush1.msra.mxu0 0.0
  %1961 = vmatprep.subr.mxu0 0.0
  %1962 = vmatpush1.msra.mxu0 0.0
  %1963 = vmatprep.subr.mxu0 0.0
  %1964 = vmatpush1.msra.mxu0 0.0
  %1965 = vmatprep.subr.mxu0 0.0
  %1966 = vmatpush1.msra.mxu0 0.0
  %1967 = vmatprep.subr.mxu0 0.0
  %1968 = vmatpush1.msra.mxu0 %v266
  %1969 = vmatprep.subr.mxu0 0.0
  %1970 = vmatpush1.msra.mxu0 %v263
  %1971 = vmatprep.subr.mxu0 0.0
  %1972 = vmatpush1.msra.mxu0 %v260
  %1973 = vmatprep.subr.mxu0 0.0
  %1974 = vmatpush1.msra.mxu0 %v257
  %1975 = vmatprep.subr.mxu0 0.0
  %1976 = vmatpush1.msra.mxu0 %v254
  %1977 = vmatprep.subr.mxu0 0.0
  %1978 = vmatpush1.msra.mxu0 %v251
  %1979 = vmatprep.subr.mxu0 0.0
  %1980 = vmatpush1.msra.mxu0 %v248
  %1981 = vmatprep.subr.mxu0 0.0
  %1982 = vmatpush1.msra.mxu0 %v245
  %1983 = vmatprep.subr.mxu0 0.0
  %1984 = vmatpush1.msra.mxu0 %v242
  %1985 = vmatprep.subr.mxu0 0.0
  %1986 = vmatpush1.msra.mxu0 %v239
  %1987 = vmatprep.subr.mxu0 0.0
  %1988 = vmatpush1.msra.mxu0 %v236
  %1989 = vmatprep.subr.mxu0 0.0
  %1990 = vmatpush1.msra.mxu0 %v233
  %1991 = vmatprep.subr.mxu0 0.0
  %1992 = vmatpush2.msra.mxu0 0.0
  %1993 = vmatprep.subr.mxu0 0.0
  %1994 = vmatpush2.msra.mxu0 0.0
  %1995 = vmatprep.subr.mxu0 0.0
  %1996 = vmatpush2.msra.mxu0 0.0
  %1997 = vmatprep.subr.mxu0 0.0
  %1998 = vmatpush2.msra.mxu0 0.0
  %1999 = vmatprep.subr.mxu0 0.0
  %2000 = vmatpush2.msra.mxu0 0.0
  %2001 = vmatprep.subr.mxu0 0.0
  %2002 = vmatpush2.msra.mxu0 0.0
  %2003 = vmatprep.subr.mxu0 0.0
  %2004 = vmatpush2.msra.mxu0 0.0
  %2005 = vmatprep.subr.mxu0 0.0
  %2006 = vmatpush2.msra.mxu0 0.0
  %2007 = vmatprep.subr.mxu0 0.0
  %2008 = vmatpush2.msra.mxu0 0.0
  %2009 = vmatprep.subr.mxu0 0.0
  %2010 = vmatpush2.msra.mxu0 0.0
  %2011 = vmatprep.subr.mxu0 0.0
  %2012 = vmatpush2.msra.mxu0 0.0
  %2013 = vmatprep.subr.mxu0 0.0
  %2014 = vmatpush2.msra.mxu0 0.0
  %2015 = vmatprep.subr.mxu0 0.0
  %2016 = vmatpush2.msra.mxu0 0.0
  %2017 = vmatprep.subr.mxu0 0.0
  %2018 = vmatpush2.msra.mxu0 0.0
  %2019 = vmatprep.subr.mxu0 0.0
  %2020 = vmatpush2.msra.mxu0 0.0
  %2021 = vmatprep.subr.mxu0 0.0
  %2022 = vmatpush2.msra.mxu0 0.0
  %2023 = vmatprep.mubr.f32.mxu0 0.0
  %2024 = vmatmul.mubr.f32.gmra.mxu0 %v1887
  %v2025 = vpop.f32.mrf.mxu0
  %v2026 = vadd.f32 %v227, %v2025
  %v2027 = vpop.f32.mrf.mxu0
  %2028 = vdwg.mxu0
  %v2029 = vxor.u32 %v1957, 2147483648
  %v2030 = vmul.f32 %v2029, 1.442695
  %v2031 = vpow.pop %v2030
  %v2032 = vadd.f32 %v2031, 1.0
  %v2033 = vrcp.pop %v2032
  %v2034 = vmul.f32 1.0, %v2033
  %2036 = vrot.lane.b32.xlu0 %v1957, 32
  %v2037 = vpop.permute.xlu0 %2036
  %v2039 = vmul.f32 %v2034, %v2037
  %2041 = vrot.lane.b32.xlu0 %v2039, 64
  %v2042 = vpop.permute.xlu0 %2041
  %v2044 = vadd.f32 %v1957, %v2042
  %v2045 = vtanh.pop %v2044
  %v2046 = vsub.f32 1.0, %v2034
  %2048 = vrot.lane.b32.xlu0 %v2045, 96
  %v2049 = vpop.permute.xlu0 %2048
  %v2051 = vmul.f32 %v2046, %v2049
  %v2052 = vmul.f32 %v2034, %v1850
  %v2053 = vadd.f32 %v2051, %v2052
  %v2054 = vxor.u32 %v2026, 2147483648
  %v2055 = vmul.f32 %v2054, 1.442695
  %v2056 = vpow.pop %v2055
  %v2057 = vadd.f32 %v2056, 1.0
  %v2058 = vrcp.pop %v2057
  %v2059 = vmul.f32 1.0, %v2058
  %2061 = vrot.lane.b32.xlu0 %v2026, 32
  %v2062 = vpop.permute.xlu0 %2061
  %v2064 = vmul.f32 %v2059, %v2062
  %2066 = vrot.lane.b32.xlu0 %v2064, 64
  %v2067 = vpop.permute.xlu0 %2066
  %v2069 = vadd.f32 %v2026, %v2067
  %v2070 = vtanh.pop %v2069
  %v2071 = vsub.f32 1.0, %v2059
  %2073 = vrot.lane.b32.xlu0 %v2070, 96
  %v2074 = vpop.permute.xlu0 %2073
  %v2076 = vmul.f32 %v2071, %v2074
  %v2077 = vmul.f32 %v2059, %v1875
  %v2078 = vadd.f32 %v2076, %v2077
  %2080 = vrot.lane.b32.xlu0 %v2078, 32
  %v2081 = vpop.permute.xlu0 %2080
  %v2083 = vsel %vm371, %v1878, %v2053
  %v2084 = vsel %vm373, %v2083, %v2081
  %v2086 = vsel %vm267, %v2084, 0
  %2088 = vmatprep.subr.mxu0 0.0
  %2089 = vmatpush1.msra.mxu0 0.0
  %2090 = vmatprep.subr.mxu0 0.0
  %2091 = vmatpush1.msra.mxu0 0.0
  %2092 = vmatprep.subr.mxu0 0.0
  %2093 = vmatpush1.msra.mxu0 0.0
  %2094 = vmatprep.subr.mxu0 0.0
  %2095 = vmatpush1.msra.mxu0 0.0
  %2096 = vmatprep.subr.mxu0 0.0
  %2097 = vmatpush1.msra.mxu0 %v266
  %2098 = vmatprep.subr.mxu0 0.0
  %2099 = vmatpush1.msra.mxu0 %v263
  %2100 = vmatprep.subr.mxu0 0.0
  %2101 = vmatpush1.msra.mxu0 %v260
  %2102 = vmatprep.subr.mxu0 0.0
  %2103 = vmatpush1.msra.mxu0 %v257
  %2104 = vmatprep.subr.mxu0 0.0
  %2105 = vmatpush1.msra.mxu0 %v254
  %2106 = vmatprep.subr.mxu0 0.0
  %2107 = vmatpush1.msra.mxu0 %v251
  %2108 = vmatprep.subr.mxu0 0.0
  %2109 = vmatpush1.msra.mxu0 %v248
  %2110 = vmatprep.subr.mxu0 0.0
  %2111 = vmatpush1.msra.mxu0 %v245
  %2112 = vmatprep.subr.mxu0 0.0
  %2113 = vmatpush1.msra.mxu0 %v242
  %2114 = vmatprep.subr.mxu0 0.0
  %2115 = vmatpush1.msra.mxu0 %v239
  %2116 = vmatprep.subr.mxu0 0.0
  %2117 = vmatpush1.msra.mxu0 %v236
  %2118 = vmatprep.subr.mxu0 0.0
  %2119 = vmatpush1.msra.mxu0 %v233
  %2120 = vmatprep.subr.mxu0 0.0
  %2121 = vmatpush2.msra.mxu0 0.0
  %2122 = vmatprep.subr.mxu0 0.0
  %2123 = vmatpush2.msra.mxu0 0.0
  %2124 = vmatprep.subr.mxu0 0.0
  %2125 = vmatpush2.msra.mxu0 0.0
  %2126 = vmatprep.subr.mxu0 0.0
  %2127 = vmatpush2.msra.mxu0 0.0
  %2128 = vmatprep.subr.mxu0 0.0
  %2129 = vmatpush2.msra.mxu0 0.0
  %2130 = vmatprep.subr.mxu0 0.0
  %2131 = vmatpush2.msra.mxu0 0.0
  %2132 = vmatprep.subr.mxu0 0.0
  %2133 = vmatpush2.msra.mxu0 0.0
  %2134 = vmatprep.subr.mxu0 0.0
  %2135 = vmatpush2.msra.mxu0 0.0
  %2136 = vmatprep.subr.mxu0 0.0
  %2137 = vmatpush2.msra.mxu0 0.0
  %2138 = vmatprep.subr.mxu0 0.0
  %2139 = vmatpush2.msra.mxu0 0.0
  %2140 = vmatprep.subr.mxu0 0.0
  %2141 = vmatpush2.msra.mxu0 0.0
  %2142 = vmatprep.subr.mxu0 0.0
  %2143 = vmatpush2.msra.mxu0 0.0
  %2144 = vmatprep.subr.mxu0 0.0
  %2145 = vmatpush2.msra.mxu0 0.0
  %2146 = vmatprep.subr.mxu0 0.0
  %2147 = vmatpush2.msra.mxu0 0.0
  %2148 = vmatprep.subr.mxu0 0.0
  %2149 = vmatpush2.msra.mxu0 0.0
  %2150 = vmatprep.subr.mxu0 0.0
  %2151 = vmatpush2.msra.mxu0 0.0
  %2152 = vmatprep.mubr.f32.mxu0 0.0
  %2153 = vmatmul.mubr.f32.gmra.mxu0 %v2086
  %v2154 = vpop.f32.mrf.mxu0
  %v2155 = vadd.f32 %v227, %v2154
  %v2156 = vpop.f32.mrf.mxu0
  %2157 = vdwg.mxu0
  %v2158 = vxor.u32 %v2155, 2147483648
  %v2159 = vmul.f32 %v2158, 1.442695
  %v2160 = vpow.pop %v2159
  %v2161 = vadd.f32 %v2160, 1.0
  %v2162 = vrcp.pop %v2161
  %v2163 = vmul.f32 1.0, %v2162
  %2165 = vrot.lane.b32.xlu0 %v2155, 32
  %v2166 = vpop.permute.xlu0 %2165
  %v2168 = vmul.f32 %v2163, %v2166
  %2170 = vrot.lane.b32.xlu0 %v2168, 64
  %v2171 = vpop.permute.xlu0 %2170
  %v2173 = vadd.f32 %v2155, %v2171
  %v2174 = vtanh.pop %v2173
  %v2175 = vsub.f32 1.0, %v2163
  %2177 = vrot.lane.b32.xlu0 %v2174, 96
  %v2178 = vpop.permute.xlu0 %2177
  %v2180 = vmul.f32 %v2175, %v2178
  %v2181 = vmul.f32 %v2163, %v2078
  %v2182 = vadd.f32 %v2180, %v2181
  %v2183 = vld [vmem:[%s4] sm:$0xff]
  %v2184 = vld [vmem:[%s4 + $0x8] sm:$0xff]
  %v2185 = vld [vmem:[%s4 + $0x10] sm:$0xff]
  %v2186 = vld [vmem:[%s4 + $0x18] sm:$0xff]
  %v2187 = vld [vmem:[%s5] sm:$0x1]
  %v2189 = vlaneseq
  %v2190 = vshrl.u32 %v2189, 7
  %v2191 = vsub.s32 0, %v2190
  %v2192 = vrot.slane %v2187, %v2191
  %2195 = vrot.lane.b32.xlu0 %v725, 96
  %v2196 = vpop.permute.xlu0 %2195
  %2197 = vrot.lane.b32.xlu0 %v955, 96
  %v2198 = vpop.permute.xlu0 %2197
  %2199 = vrot.lane.b32.xlu0 %v1185, 96
  %v2200 = vpop.permute.xlu0 %2199
  %2201 = vrot.lane.b32.xlu0 %v1415, 96
  %v2202 = vpop.permute.xlu0 %2201
  %2203 = vrot.lane.b32.xlu0 %v1645, 96
  %v2204 = vpop.permute.xlu0 %2203
  %2205 = vrot.lane.b32.xlu0 %v1875, 96
  %v2206 = vpop.permute.xlu0 %2205
  %2207 = vrot.lane.b32.xlu0 %v2078, 96
  %v2208 = vpop.permute.xlu0 %2207
  %2209 = vrot.lane.b32.xlu0 %v2182, 96
  %v2210 = vpop.permute.xlu0 %2209
  %v2211 = vsel %vm371, %v2196, 0
  %v2213 = vsel %vm371, %v2198, 0
  %v2215 = vsel %vm371, %v2200, 0
  %v2217 = vsel %vm371, %v2202, 0
  %v2219 = vsel %vm371, %v2204, 0
  %v2221 = vsel %vm371, %v2206, 0
  %v2223 = vsel %vm371, %v2208, 0
  %v2225 = vsel %vm371, %v2210, 0
  %2227 = vmatprep.subr.mxu0 0.0
  %2228 = vmatpush1.msra.mxu0 0.0
  %2229 = vmatprep.subr.mxu0 0.0
  %2230 = vmatpush1.msra.mxu0 0.0
  %2231 = vmatprep.subr.mxu0 0.0
  %2232 = vmatpush1.msra.mxu0 0.0
  %2233 = vmatprep.subr.mxu0 0.0
  %2234 = vmatpush1.msra.mxu0 0.0
  %2235 = vmatprep.subr.mxu0 0.0
  %2236 = vmatpush1.msra.mxu0 0.0
  %2237 = vmatprep.subr.mxu0 0.0
  %2238 = vmatpush1.msra.mxu0 0.0
  %2239 = vmatprep.subr.mxu0 0.0
  %2240 = vmatpush1.msra.mxu0 0.0
  %2241 = vmatprep.subr.mxu0 0.0
  %2242 = vmatpush1.msra.mxu0 0.0
  %2243 = vmatprep.subr.mxu0 0.0
  %2244 = vmatpush1.msra.mxu0 0.0
  %2245 = vmatprep.subr.mxu0 0.0
  %2246 = vmatpush1.msra.mxu0 0.0
  %2247 = vmatprep.subr.mxu0 0.0
  %2248 = vmatpush1.msra.mxu0 0.0
  %2249 = vmatprep.subr.mxu0 0.0
  %2250 = vmatpush1.msra.mxu0 0.0
  %2251 = vmatprep.subr.mxu0 0.0
  %2252 = vmatpush1.msra.mxu0 %v2186
  %2253 = vmatprep.subr.mxu0 0.0
  %2254 = vmatpush1.msra.mxu0 %v2185
  %2255 = vmatprep.subr.mxu0 0.0
  %2256 = vmatpush1.msra.mxu0 %v2184
  %2257 = vmatprep.subr.mxu0 0.0
  %2258 = vmatpush1.msra.mxu0 %v2183
  %2259 = vmatprep.subr.mxu0 0.0
  %2260 = vmatpush2.msra.mxu0 0.0
  %2261 = vmatprep.subr.mxu0 0.0
  %2262 = vmatpush2.msra.mxu0 0.0
  %2263 = vmatprep.subr.mxu0 0.0
  %2264 = vmatpush2.msra.mxu0 0.0
  %2265 = vmatprep.subr.mxu0 0.0
  %2266 = vmatpush2.msra.mxu0 0.0
  %2267 = vmatprep.subr.mxu0 0.0
  %2268 = vmatpush2.msra.mxu0 0.0
  %2269 = vmatprep.subr.mxu0 0.0
  %2270 = vmatpush2.msra.mxu0 0.0
  %2271 = vmatprep.subr.mxu0 0.0
  %2272 = vmatpush2.msra.mxu0 0.0
  %2273 = vmatprep.subr.mxu0 0.0
  %2274 = vmatpush2.msra.mxu0 0.0
  %2275 = vmatprep.subr.mxu0 0.0
  %2276 = vmatpush2.msra.mxu0 0.0
  %2277 = vmatprep.subr.mxu0 0.0
  %2278 = vmatpush2.msra.mxu0 0.0
  %2279 = vmatprep.subr.mxu0 0.0
  %2280 = vmatpush2.msra.mxu0 0.0
  %2281 = vmatprep.subr.mxu0 0.0
  %2282 = vmatpush2.msra.mxu0 0.0
  %2283 = vmatprep.subr.mxu0 0.0
  %2284 = vmatpush2.msra.mxu0 0.0
  %2285 = vmatprep.subr.mxu0 0.0
  %2286 = vmatpush2.msra.mxu0 0.0
  %2287 = vmatprep.subr.mxu0 0.0
  %2288 = vmatpush2.msra.mxu0 0.0
  %2289 = vmatprep.subr.mxu0 0.0
  %2290 = vmatpush2.msra.mxu0 0.0
  %2291 = vmatprep.mubr.f32.mxu0 0.0
  %2292 = vmatmul.mubr.f32.gmra.mxu0 %v2211
  %v2293 = vpop.f32.mrf.mxu0
  %v2294 = vadd.f32 %v2192, %v2293
  %v2295 = vpop.f32.mrf.mxu0
  %2296 = vmatprep.mubr.f32.mxu0 0.0
  %2297 = vmatmul.mubr.f32.gmra.mxu0 %v2213
  %v2298 = vpop.f32.mrf.mxu0
  %v2299 = vadd.f32 %v2192, %v2298
  %v2300 = vpop.f32.mrf.mxu0
  %2301 = vmatprep.mubr.f32.mxu0 0.0
  %2302 = vmatmul.mubr.f32.gmra.mxu0 %v2215
  %v2303 = vpop.f32.mrf.mxu0
  %v2304 = vadd.f32 %v2192, %v2303
  %v2305 = vpop.f32.mrf.mxu0
  %2306 = vmatprep.mubr.f32.mxu0 0.0
  %2307 = vmatmul.mubr.f32.gmra.mxu0 %v2217
  %v2308 = vpop.f32.mrf.mxu0
  %v2309 = vadd.f32 %v2192, %v2308
  %v2310 = vpop.f32.mrf.mxu0
  %2311 = vmatprep.mubr.f32.mxu0 0.0
  %2312 = vmatmul.mubr.f32.gmra.mxu0 %v2219
  %v2313 = vpop.f32.mrf.mxu0
  %v2314 = vadd.f32 %v2192, %v2313
  %v2315 = vpop.f32.mrf.mxu0
  %2316 = vmatprep.mubr.f32.mxu0 0.0
  %2317 = vmatmul.mubr.f32.gmra.mxu0 %v2221
  %v2318 = vpop.f32.mrf.mxu0
  %v2319 = vadd.f32 %v2192, %v2318
  %v2320 = vpop.f32.mrf.mxu0
  %2321 = vmatprep.mubr.f32.mxu0 0.0
  %2322 = vmatmul.mubr.f32.gmra.mxu0 %v2223
  %v2323 = vpop.f32.mrf.mxu0
  %v2324 = vadd.f32 %v2192, %v2323
  %v2325 = vpop.f32.mrf.mxu0
  %2326 = vmatprep.mubr.f32.mxu0 0.0
  %2327 = vmatmul.mubr.f32.gmra.mxu0 %v2225
  %v2328 = vpop.f32.mrf.mxu0
  %v2329 = vadd.f32 %v2192, %v2328
  %v2330 = vpop.f32.mrf.mxu0
  %2331 = vdwg.mxu0
  %2332 = vst [vmem:[%s6] sm:$0xff] %v2294
  %2333 = vst [vmem:[%s6 + $0x8] sm:$0xff] %v2299
  %2334 = vst [vmem:[%s6 + $0x10] sm:$0xff] %v2304
  %2335 = vst [vmem:[%s6 + $0x18] sm:$0xff] %v2309
  %2336 = vst [vmem:[%s6 + $0x20] sm:$0xff] %v2314
  %2337 = vst [vmem:[%s6 + $0x28] sm:$0xff] %v2319
  %2338 = vst [vmem:[%s6 + $0x30] sm:$0xff] %v2324
  %2339 = vst [vmem:[%s6 + $0x38] sm:$0xff] %v2329
  // Predicated region
  $region26: #{hypernym_hyponym_gru_forward.1} parent=0 // pred_check
    _
  $region27: #{hypernym_hyponym_gru_forward.1} parent=0 // pred_check_branch
    %2341 = sbr.rel (0) target = $region29
  $region28: #{hypernym_hyponym_gru_forward.1} parent=0 // pred_region
    _
  $region29: #{hypernym_hyponym_gru_forward.1} parent=0 // pred_fallthru
    _
  // Predicated region
  $region30: #{hypernym_hyponym_gru_forward.1} parent=0 // pred_check
    _
  $region31: #{hypernym_hyponym_gru_forward.1} parent=0 // pred_check_branch
    %2343 = sbr.rel (0) target = $region33
  $region32: #{hypernym_hyponym_gru_forward.1} parent=0 // pred_region
    _
  $region33: #{hypernym_hyponym_gru_forward.1} parent=0 // pred_fallthru
    _

</llo_original>
